<compile_context>
chip_gen: v5e
topology: v5e:2x2
jax: 0.10.0
libtpu: 0.0.40
codegen_flags: <defaults>
</compile_context>

<pallas_src>
import functools
import math

import jax
import jax.numpy as jnp
from jax.experimental import pallas as pl
from jax.experimental.pallas import tpu as pltpu


STACKED_ORDER = ("wqkv", "bqkv", "wo", "bo", "g1", "be1",
                 "w1", "b1", "w2", "b2", "g2", "be2")


def _fused_blocks_kernel(*refs, heads, use_coords):
    if use_coords:
        x_ref, coords_ref = refs[0], refs[1]
        rest = refs[2:]
    else:
        x_ref, coords_ref = refs[0], None
        rest = refs[1:]
    (wqkv_ref, bqkv_ref, wo_ref, bo_ref, g1_ref, be1_ref,
     w1_ref, b1_ref, w2_ref, b2_ref, g2_ref, be2_ref,
     o_ref, carry_ref) = rest

    l = pl.program_id(1)        # layer axis (sequential / "arbitrary")

    @pl.when(l == 0)
    def _():
        # Layer 0 consumes the kernel input; later layers consume the carry.
        carry_ref[...] = x_ref[...].astype(jnp.float32)

    Bt, S, E = carry_ref.shape
    H = heads
    dh = E // H

    xin = carry_ref[...]                                   # (Bt, S, E) f32
    if use_coords:
        # coords block is (1, S, E) or (Bt, S, E); broadcast over batch here.
        xin = xin + coords_ref[...].astype(jnp.float32)

    xf = xin.reshape(Bt * S, E)                            # row-dense 2D view
    x_bf = xf.astype(jnp.bfloat16)                         # MXU-native input

    # ---- fused QKV projection: one (Bt*S, E) x (E, 3E) MXU matmul.
    # The 1/sqrt(dh) softmax scale is pre-folded into the Q columns/bias.
    qkv = (jnp.dot(x_bf, wqkv_ref[0], preferred_element_type=jnp.float32)
           + bqkv_ref[0])
    q2 = qkv[:, 0 * E:1 * E].astype(jnp.bfloat16)          # early bf16 casts
    k2 = qkv[:, 1 * E:2 * E].astype(jnp.bfloat16)
    v2 = qkv[:, 2 * E:3 * E].astype(jnp.bfloat16)

    def split_heads(t2d):
        # (Bt*S, E) -> (Bt*H, S, dh) using only static slices plus a
        # leading-axis concatenate (no transpose of tiled dims).
        parts = [t2d[:, h * dh:(h + 1) * dh].reshape(Bt, 1, S, dh)
                 for h in range(H)]
        return jnp.concatenate(parts, axis=1).reshape(Bt * H, S, dh)

    qh = split_heads(q2)
    kh = split_heads(k2)
    vh = split_heads(v2)

    # ---- head-batched attention: two batched MXU streams over Bt*H heads ----
    s = jnp.einsum("bqd,bkd->bqk", qh, kh,
                   preferred_element_type=jnp.float32)     # (Bt*H, S, S)
    s = s - jnp.max(s, axis=-1, keepdims=True)             # f32 softmax
    p = jnp.exp(s)
    p = p * pl.reciprocal(jnp.sum(p, axis=-1, keepdims=True), approx=True)
    oh = jnp.einsum("bqk,bkd->bqd", p.astype(jnp.bfloat16), vh,
                    preferred_element_type=jnp.float32)    # (Bt*H, S, dh)
    # TODO(synk): for long S, tile the key axis with an online (flash-style)
    # softmax instead of materializing the full (Bt*H, S, S) score tensor.

    # ---- merge heads, then ONE full-width output projection (K = E) ----
    o4 = oh.reshape(Bt, H, S, dh).astype(jnp.bfloat16)
    om = jnp.concatenate([o4[:, h] for h in range(H)], axis=-1)  # (Bt, S, E)
    attn = (jnp.dot(om.reshape(Bt * S, E), wo_ref[0],
                    preferred_element_type=jnp.float32) + bo_ref[0])

    # ---- residual + layer norm 1 (vector math kept in f32) ----
    y = attn + xf
    mu = jnp.mean(y, axis=-1, keepdims=True)
    var = jnp.mean((y - mu) ** 2, axis=-1, keepdims=True)
    y = (y - mu) * jax.lax.rsqrt(var + 1e-5) * g1_ref[0] + be1_ref[0]

    # ---- feed-forward (relu); dropout disabled (eval mode) ----
    h1 = (jnp.dot(y.astype(jnp.bfloat16), w1_ref[0],
                  preferred_element_type=jnp.float32) + b1_ref[0])
    h1 = jnp.maximum(h1, 0.0).astype(jnp.bfloat16)   # early bf16: halves the
    ff = (jnp.dot(h1, w2_ref[0],                     # largest live temporary
                  preferred_element_type=jnp.float32) + b2_ref[0])
    # TODO(synk): for very large E*forward_expansion, K-tile the FFN matmuls
    # (pltpu.emit_pipeline / extra grid axis) instead of holding w1+w2 resident.

    # ---- residual + layer norm 2 ----
    z = ff + y
    mu2 = jnp.mean(z, axis=-1, keepdims=True)
    var2 = jnp.mean((z - mu2) ** 2, axis=-1, keepdims=True)
    z = (z - mu2) * jax.lax.rsqrt(var2 + 1e-5) * g2_ref[0] + be2_ref[0]

    z3 = z.reshape(Bt, S, E)
    carry_ref[...] = z3                                    # feed next layer
    o_ref[...] = z3.astype(o_ref.dtype)                    # this layer's slice


def _stack_layer_params(layer_params, heads):
    """Stack per-layer params along a leading `layers` axis, fuse Wq/Wk/Wv into
    one (E, 3E) matrix with the 1/sqrt(dh) softmax scale folded into the Q
    columns + bias, and cast the big matmul weights to bf16 for the MXU
    (biases / LayerNorm params stay f32)."""
    E = layer_params[0]["wq"].shape[0]
    scale = 1.0 / math.sqrt(E // heads)

    def cat_qkv(p, prefix):
        q, k, v = p[prefix + "q"], p[prefix + "k"], p[prefix + "v"]
        return jnp.concatenate([q * scale, k, v], axis=-1)

    return {
        "wqkv": jnp.stack([cat_qkv(p, "w") for p in layer_params]
                          ).astype(jnp.bfloat16),
        "bqkv": jnp.stack([cat_qkv(p, "b") for p in layer_params]),
        "wo":  jnp.stack([p["wo"] for p in layer_params]).astype(jnp.bfloat16),
        "bo":  jnp.stack([p["bo"] for p in layer_params]),
        "g1":  jnp.stack([p["g1"] for p in layer_params]),
        "be1": jnp.stack([p["be1"] for p in layer_params]),
        "w1":  jnp.stack([p["w1"] for p in layer_params]).astype(jnp.bfloat16),
        "b1":  jnp.stack([p["b1"] for p in layer_params]),
        "w2":  jnp.stack([p["w2"] for p in layer_params]).astype(jnp.bfloat16),
        "b2":  jnp.stack([p["b2"] for p in layer_params]),
        "g2":  jnp.stack([p["g2"] for p in layer_params]),
        "be2": jnp.stack([p["be2"] for p in layer_params]),
    }


def _vmem_limit_bytes(b_tile, S, E, F, heads, use_coords, out_itemsize):
    """Size the scoped-VMEM limit to the real per-step footprint (defaults are
    only 16/32 MiB) while staying under v7x's 64 MiB physical VMEM."""
    bf16, f32 = 2, 4
    dh = E // heads
    weights = 2 * ((3 * E * E + E * E + E * F + F * E) * bf16   # double-buffered
                   + (3 * E + 6 * E + F) * f32)                 # biases + LN
    io = 2 * b_tile * S * E * f32                               # x (dbl-buffered)
    if use_coords:
        io += 2 * b_tile * S * E * f32
    io += 2 * b_tile * S * E * out_itemsize                     # output block
    carry = b_tile * S * E * f32
    interm = (b_tile * S * 3 * E * f32                          # qkv
              + 3 * b_tile * heads * S * dh * bf16              # q/k/v head-major
              + 2 * b_tile * heads * S * S * f32                # scores + probs
              + b_tile * S * F * (f32 + bf16)                   # h1
              + 6 * b_tile * S * E * f32)                       # misc temporaries
    est = weights + io + carry + interm
    return int(min(max(int(1.25 * est), 32 << 20), 56 << 20))


def multihead_attention_block(x, layer_params, heads, coordinates=None,
                              b_tile=None):
    """Mirrors MultiHead_Attention_Block.forward with a single pallas_call:
    `layers` chained decoder blocks + the torch.cat(dim=1) of their outputs.

    Shape contract for good TPU utilisation: E (embeddsize) a multiple of 128,
    S a multiple of 8."""
    B, S, E = x.shape
    L = len(layer_params)
    assert E % heads == 0
    stacked = _stack_layer_params(layer_params, heads)
    F = stacked["w1"].shape[-1]
    use_coords = coordinates is not None

    if b_tile is None:
        # Largest batch tile whose f32 activation slab stays modest; the grid's
        # leading "parallel" axis covers the rest of the batch.
        b_tile = 1
        for cand in range(1, B + 1):
            if B % cand == 0 and cand * S * E * 4 <= (2 << 20):
                b_tile = cand
    assert B % b_tile == 0
    nb = B // b_tile

    kernel = functools.partial(_fused_blocks_kernel, heads=heads,
                               use_coords=use_coords)

    in_specs = [pl.BlockSpec((b_tile, S, E), lambda b, l: (b, 0, 0))]
    inputs = [x]
    if use_coords:
        coords = jnp.asarray(coordinates, dtype=x.dtype)
        if coords.ndim == 2:                       # (S, E) -> (1, S, E)
            coords = coords[None]
        if coords.shape[0] == 1:
            # Broadcast over batch inside the kernel (no host-side broadcast).
            in_specs.append(pl.BlockSpec((1, S, E), lambda b, l: (0, 0, 0)))
        else:
            in_specs.append(pl.BlockSpec((b_tile, S, E), lambda b, l: (b, 0, 0)))
        inputs.append(coords)

    param_arrays = [stacked[name] for name in STACKED_ORDER]
    in_specs += [pl.BlockSpec((1,) + a.shape[1:], lambda b, l: (l, 0, 0))
                 for a in param_arrays]
    inputs += param_arrays

    return pl.pallas_call(
        kernel,
        out_shape=jax.ShapeDtypeStruct((B, L * S, E), x.dtype),
        grid=(nb, L),
        in_specs=in_specs,
        out_specs=pl.BlockSpec((b_tile, S, E), lambda b, l: (b, l, 0)),
        scratch_shapes=[pltpu.VMEM((b_tile, S, E), jnp.float32)],  # layer carry
        compiler_params=pltpu.CompilerParams(
            # Batch tiles are independent ("parallel", megacore-shardable);
            # the layer axis carries the activation -> sequential.
            dimension_semantics=("parallel", "arbitrary"),
            vmem_limit_bytes=_vmem_limit_bytes(
                b_tile, S, E, F, heads, use_coords, x.dtype.itemsize)),
    )(*inputs)


def init_layer_params(key, embeddsize, forward_expansion):
    hidden = embeddsize * forward_expansion
    ks = jax.random.split(key, 6)
    w = lambda k, shape: (0.02 * jax.random.normal(k, shape)).astype(jnp.float32)
    return {
        "wq": w(ks[0], (embeddsize, embeddsize)),
        "bq": jnp.zeros((1, embeddsize), jnp.float32),
        "wk": w(ks[1], (embeddsize, embeddsize)),
        "bk": jnp.zeros((1, embeddsize), jnp.float32),
        "wv": w(ks[2], (embeddsize, embeddsize)),
        "bv": jnp.zeros((1, embeddsize), jnp.float32),
        "wo": w(ks[3], (embeddsize, embeddsize)),
        "bo": jnp.zeros((1, embeddsize), jnp.float32),
        "g1": jnp.ones((1, embeddsize), jnp.float32),
        "be1": jnp.zeros((1, embeddsize), jnp.float32),
        "w1": w(ks[4], (embeddsize, hidden)),
        "b1": jnp.zeros((1, hidden), jnp.float32),
        "w2": w(ks[5], (hidden, embeddsize)),
        "b2": jnp.zeros((1, embeddsize), jnp.float32),
        "g2": jnp.ones((1, embeddsize), jnp.float32),
        "be2": jnp.zeros((1, embeddsize), jnp.float32),
    }


if __name__ == "__main__":
    layers = 2
    heads = 4
    embeddsize = 128          # lane-dense shape contract: multiple of 128
    forward_expansion = 4
    # dropout = 0.0 (eval mode -> identity)

    B, S = 2, 8
    key = jax.random.PRNGKey(0)
    kx, kp = jax.random.split(key)
    x = jax.random.normal(kx, (B, S, embeddsize), dtype=jnp.float32)

    layer_params = [
        init_layer_params(jax.random.fold_in(kp, i), embeddsize, forward_expansion)
        for i in range(layers)
    ]

    # b_tile=1 -> grid (2, 2): exercises the "parallel" batch-tile axis too.
    out = multihead_attention_block(x, layer_params, heads, coordinates=None,
                                    b_tile=1)
    out = jax.block_until_ready(out)
    assert out.shape == (B, layers * S, embeddsize), out.shape
    assert bool(jnp.all(jnp.isfinite(out)))
    print("KERNEL_OK")
</pallas_src>

<mosaic_0001>
module attributes {stable_mosaic.version = 11 : i64} {
  func.func @_fused_blocks_kernel(%arg0: i32, %arg1: i32, %arg2: memref<1x8x128xf32, #tpu.memory_space<vmem>>, %arg3: memref<1x128x384xbf16, #tpu.memory_space<vmem>>, %arg4: memref<1x1x384xf32, #tpu.memory_space<vmem>>, %arg5: memref<1x128x128xbf16, #tpu.memory_space<vmem>>, %arg6: memref<1x1x128xf32, #tpu.memory_space<vmem>>, %arg7: memref<1x1x128xf32, #tpu.memory_space<vmem>>, %arg8: memref<1x1x128xf32, #tpu.memory_space<vmem>>, %arg9: memref<1x128x512xbf16, #tpu.memory_space<vmem>>, %arg10: memref<1x1x512xf32, #tpu.memory_space<vmem>>, %arg11: memref<1x512x128xbf16, #tpu.memory_space<vmem>>, %arg12: memref<1x1x128xf32, #tpu.memory_space<vmem>>, %arg13: memref<1x1x128xf32, #tpu.memory_space<vmem>>, %arg14: memref<1x1x128xf32, #tpu.memory_space<vmem>>, %arg15: memref<1x8x128xf32, #tpu.memory_space<vmem>>, %arg16: memref<1x8x128xf32, #tpu.memory_space<vmem>>) attributes {dimension_semantics = [#tpu.dimension_semantics<parallel>, #tpu.dimension_semantics<arbitrary>], iteration_bounds = array<i64: 2, 2>, scalar_prefetch = 0 : i64, scratch_operands = 1 : i64, tpu.core_type = #tpu.core_type<tc>, window_params = [{transform_indices = @transform_0, window_bounds = array<i64: 1, 8, 128>}, {transform_indices = @transform_1, window_bounds = array<i64: 1, 128, 384>}, {transform_indices = @transform_2, window_bounds = array<i64: 1, 1, 384>}, {transform_indices = @transform_3, window_bounds = array<i64: 1, 128, 128>}, {transform_indices = @transform_4, window_bounds = array<i64: 1, 1, 128>}, {transform_indices = @transform_5, window_bounds = array<i64: 1, 1, 128>}, {transform_indices = @transform_6, window_bounds = array<i64: 1, 1, 128>}, {transform_indices = @transform_7, window_bounds = array<i64: 1, 128, 512>}, {transform_indices = @transform_8, window_bounds = array<i64: 1, 1, 512>}, {transform_indices = @transform_9, window_bounds = array<i64: 1, 512, 128>}, {transform_indices = @transform_10, window_bounds = array<i64: 1, 1, 128>}, {transform_indices = @transform_11, window_bounds = array<i64: 1, 1, 128>}, {transform_indices = @transform_12, window_bounds = array<i64: 1, 1, 128>}, {transform_indices = @transform_13, window_bounds = array<i64: 1, 8, 128>}]} {
    %c0_i32 = arith.constant 0 : i32
    %0 = arith.cmpi eq, %arg1, %c0_i32 : i32
    %1 = arith.extui %0 : i1 to i32
    %c0_i32_0 = arith.constant 0 : i32
    %2 = arith.cmpi ne, %1, %c0_i32_0 : i32
    scf.if %2 {
      %c0_63 = arith.constant 0 : index
      %c0_64 = arith.constant 0 : index
      %c0_65 = arith.constant 0 : index
      %156 = vector.load %arg2[%c0_63, %c0_64, %c0_65] : memref<1x8x128xf32, #tpu.memory_space<vmem>>, vector<1x8x128xf32>
      %c0_66 = arith.constant 0 : index
      %c0_67 = arith.constant 0 : index
      %c0_68 = arith.constant 0 : index
      %157 = vector.load %arg16[%c0_66, %c0_67, %c0_68] : memref<1x8x128xf32, #tpu.memory_space<vmem>>, vector<1x8x128xf32>
      tpu.vector_store %arg16[%c0_66, %c0_67, %c0_68], %156 {strides = array<i32>} : memref<1x8x128xf32, #tpu.memory_space<vmem>>, vector<1x8x128xf32>,
    } else {
    }
    %c0 = arith.constant 0 : index
    %c0_1 = arith.constant 0 : index
    %c0_2 = arith.constant 0 : index
    %3 = vector.load %arg16[%c0, %c0_1, %c0_2] : memref<1x8x128xf32, #tpu.memory_space<vmem>>, vector<1x8x128xf32>
    %4 = vector.shape_cast %3 : vector<1x8x128xf32> to vector<8x128xf32>
    %5 = arith.truncf %4 : vector<8x128xf32> to vector<8x128xbf16>
    %c0_3 = arith.constant 0 : index
    %c0_4 = arith.constant 0 : index
    %c0_5 = arith.constant 0 : index
    %6 = vector.load %arg3[%c0_3, %c0_4, %c0_5] : memref<1x128x384xbf16, #tpu.memory_space<vmem>>, vector<1x128x384xbf16>
    %7 = vector.shape_cast %6 : vector<1x128x384xbf16> to vector<128x384xbf16>
    %cst = arith.constant dense<0.000000e+00> : vector<8x384xf32>
    %8 = tpu.matmul %5, %7, %cst {dimension_numbers = #tpu.dot_dimension_numbers<[1], [0], [0], [1], [0, 0, 1, 1], [], []>} : vector<8x128xbf16>, vector<128x384xbf16>, vector<8x384xf32> -> vector<8x384xf32>
    %c0_6 = arith.constant 0 : index
    %c0_7 = arith.constant 0 : index
    %c0_8 = arith.constant 0 : index
    %9 = vector.load %arg4[%c0_6, %c0_7, %c0_8] : memref<1x1x384xf32, #tpu.memory_space<vmem>>, vector<1x1x384xf32>
    %10 = vector.shape_cast %9 : vector<1x1x384xf32> to vector<1x384xf32>
    %11 = vector.broadcast %10 : vector<1x384xf32> to vector<8x384xf32>
    %12 = arith.addf %8, %11 : vector<8x384xf32>
    %13 = vector.extract_strided_slice %12 {offsets = [0, 0], sizes = [8, 128], strides = [1, 1]} : vector<8x384xf32> to vector<8x128xf32>
    %14 = arith.truncf %13 : vector<8x128xf32> to vector<8x128xbf16>
    %15 = vector.extract_strided_slice %12 {offsets = [0, 128], sizes = [8, 128], strides = [1, 1]} : vector<8x384xf32> to vector<8x128xf32>
    %16 = arith.truncf %15 : vector<8x128xf32> to vector<8x128xbf16>
    %17 = vector.extract_strided_slice %12 {offsets = [0, 256], sizes = [8, 128], strides = [1, 1]} : vector<8x384xf32> to vector<8x128xf32>
    %18 = arith.truncf %17 : vector<8x128xf32> to vector<8x128xbf16>
    %19 = vector.extract_strided_slice %14 {offsets = [0, 0], sizes = [8, 32], strides = [1, 1]} : vector<8x128xbf16> to vector<8x32xbf16>
    %20 = vector.shape_cast %19 : vector<8x32xbf16> to vector<1x1x8x32xbf16>
    %21 = vector.extract_strided_slice %14 {offsets = [0, 32], sizes = [8, 32], strides = [1, 1]} : vector<8x128xbf16> to vector<8x32xbf16>
    %22 = vector.shape_cast %21 : vector<8x32xbf16> to vector<1x1x8x32xbf16>
    %23 = vector.extract_strided_slice %14 {offsets = [0, 64], sizes = [8, 32], strides = [1, 1]} : vector<8x128xbf16> to vector<8x32xbf16>
    %24 = vector.shape_cast %23 : vector<8x32xbf16> to vector<1x1x8x32xbf16>
    %25 = vector.extract_strided_slice %14 {offsets = [0, 96], sizes = [8, 32], strides = [1, 1]} : vector<8x128xbf16> to vector<8x32xbf16>
    %26 = vector.shape_cast %25 : vector<8x32xbf16> to vector<1x1x8x32xbf16>
    %27 = tpu.concatenate %20, %22, %24, %26 in 1 : vector<1x1x8x32xbf16>, vector<1x1x8x32xbf16>, vector<1x1x8x32xbf16>, vector<1x1x8x32xbf16> -> vector<1x4x8x32xbf16>
    %28 = vector.shape_cast %27 : vector<1x4x8x32xbf16> to vector<4x8x32xbf16>
    %29 = vector.extract_strided_slice %16 {offsets = [0, 0], sizes = [8, 32], strides = [1, 1]} : vector<8x128xbf16> to vector<8x32xbf16>
    %30 = vector.shape_cast %29 : vector<8x32xbf16> to vector<1x1x8x32xbf16>
    %31 = vector.extract_strided_slice %16 {offsets = [0, 32], sizes = [8, 32], strides = [1, 1]} : vector<8x128xbf16> to vector<8x32xbf16>
    %32 = vector.shape_cast %31 : vector<8x32xbf16> to vector<1x1x8x32xbf16>
    %33 = vector.extract_strided_slice %16 {offsets = [0, 64], sizes = [8, 32], strides = [1, 1]} : vector<8x128xbf16> to vector<8x32xbf16>
    %34 = vector.shape_cast %33 : vector<8x32xbf16> to vector<1x1x8x32xbf16>
    %35 = vector.extract_strided_slice %16 {offsets = [0, 96], sizes = [8, 32], strides = [1, 1]} : vector<8x128xbf16> to vector<8x32xbf16>
    %36 = vector.shape_cast %35 : vector<8x32xbf16> to vector<1x1x8x32xbf16>
    %37 = tpu.concatenate %30, %32, %34, %36 in 1 : vector<1x1x8x32xbf16>, vector<1x1x8x32xbf16>, vector<1x1x8x32xbf16>, vector<1x1x8x32xbf16> -> vector<1x4x8x32xbf16>
    %38 = vector.shape_cast %37 : vector<1x4x8x32xbf16> to vector<4x8x32xbf16>
    %39 = vector.extract_strided_slice %18 {offsets = [0, 0], sizes = [8, 32], strides = [1, 1]} : vector<8x128xbf16> to vector<8x32xbf16>
    %40 = vector.shape_cast %39 : vector<8x32xbf16> to vector<1x1x8x32xbf16>
    %41 = vector.extract_strided_slice %18 {offsets = [0, 32], sizes = [8, 32], strides = [1, 1]} : vector<8x128xbf16> to vector<8x32xbf16>
    %42 = vector.shape_cast %41 : vector<8x32xbf16> to vector<1x1x8x32xbf16>
    %43 = vector.extract_strided_slice %18 {offsets = [0, 64], sizes = [8, 32], strides = [1, 1]} : vector<8x128xbf16> to vector<8x32xbf16>
    %44 = vector.shape_cast %43 : vector<8x32xbf16> to vector<1x1x8x32xbf16>
    %45 = vector.extract_strided_slice %18 {offsets = [0, 96], sizes = [8, 32], strides = [1, 1]} : vector<8x128xbf16> to vector<8x32xbf16>
    %46 = vector.shape_cast %45 : vector<8x32xbf16> to vector<1x1x8x32xbf16>
    %47 = tpu.concatenate %40, %42, %44, %46 in 1 : vector<1x1x8x32xbf16>, vector<1x1x8x32xbf16>, vector<1x1x8x32xbf16>, vector<1x1x8x32xbf16> -> vector<1x4x8x32xbf16>
    %48 = vector.shape_cast %47 : vector<1x4x8x32xbf16> to vector<4x8x32xbf16>
    "tpu.trace_start"() <{level = 10 : i32, message = "bqd,bkd->bqk"}> : () -> ()
    %cst_9 = arith.constant dense<0.000000e+00> : vector<4x8x8xf32>
    %49 = tpu.matmul %28, %38, %cst_9 {dimension_numbers = #tpu.dot_dimension_numbers<[2], [2], [1], [1], [0, 0, 0, 1, 1, 1], [0], [0]>} : vector<4x8x32xbf16>, vector<4x8x32xbf16>, vector<4x8x8xf32> -> vector<4x8x8xf32>
    "tpu.trace_stop"() : () -> ()
    %cst_10 = arith.constant dense<0xFF800000> : vector<4x8xf32>
    %50 = vector.multi_reduction <maximumf>, %49, %cst_10 [2] : vector<4x8x8xf32> to vector<4x8xf32>
    %51 = vector.shape_cast %50 : vector<4x8xf32> to vector<4x8x1xf32>
    %52 = vector.broadcast %51 : vector<4x8x1xf32> to vector<4x8x8xf32>
    %53 = arith.subf %49, %52 : vector<4x8x8xf32>
    %54 = math.exp %53 : vector<4x8x8xf32>
    %cst_11 = arith.constant dense<0.000000e+00> : vector<4x8xf32>
    %55 = vector.multi_reduction <add>, %54, %cst_11 [2] : vector<4x8x8xf32> to vector<4x8xf32>
    %56 = vector.shape_cast %55 : vector<4x8xf32> to vector<4x8x1xf32>
    %57 = tpu.reciprocal %56 {approx = true} : vector<4x8x1xf32> -> vector<4x8x1xf32>
    %58 = vector.broadcast %57 : vector<4x8x1xf32> to vector<4x8x8xf32>
    %59 = arith.mulf %54, %58 : vector<4x8x8xf32>
    %60 = arith.truncf %59 : vector<4x8x8xf32> to vector<4x8x8xbf16>
    "tpu.trace_start"() <{level = 10 : i32, message = "bqk,bkd->bqd"}> : () -> ()
    %cst_12 = arith.constant dense<0.000000e+00> : vector<4x8x32xf32>
    %61 = tpu.matmul %60, %48, %cst_12 {dimension_numbers = #tpu.dot_dimension_numbers<[2], [1], [1], [2], [0, 0, 0, 1, 1, 2], [0], [0]>} : vector<4x8x8xbf16>, vector<4x8x32xbf16>, vector<4x8x32xf32> -> vector<4x8x32xf32>
    "tpu.trace_stop"() : () -> ()
    %62 = vector.shape_cast %61 : vector<4x8x32xf32> to vector<1x4x8x32xf32>
    %63 = arith.truncf %62 : vector<1x4x8x32xf32> to vector<1x4x8x32xbf16>
    %64 = vector.extract_strided_slice %63 {offsets = [0, 0, 0, 0], sizes = [1, 1, 8, 32], strides = [1, 1, 1, 1]} : vector<1x4x8x32xbf16> to vector<1x1x8x32xbf16>
    %65 = vector.shape_cast %64 : vector<1x1x8x32xbf16> to vector<1x8x32xbf16>
    %66 = vector.extract_strided_slice %63 {offsets = [0, 1, 0, 0], sizes = [1, 1, 8, 32], strides = [1, 1, 1, 1]} : vector<1x4x8x32xbf16> to vector<1x1x8x32xbf16>
    %67 = vector.shape_cast %66 : vector<1x1x8x32xbf16> to vector<1x8x32xbf16>
    %68 = vector.extract_strided_slice %63 {offsets = [0, 2, 0, 0], sizes = [1, 1, 8, 32], strides = [1, 1, 1, 1]} : vector<1x4x8x32xbf16> to vector<1x1x8x32xbf16>
    %69 = vector.shape_cast %68 : vector<1x1x8x32xbf16> to vector<1x8x32xbf16>
    %70 = vector.extract_strided_slice %63 {offsets = [0, 3, 0, 0], sizes = [1, 1, 8, 32], strides = [1, 1, 1, 1]} : vector<1x4x8x32xbf16> to vector<1x1x8x32xbf16>
    %71 = vector.shape_cast %70 : vector<1x1x8x32xbf16> to vector<1x8x32xbf16>
    %72 = tpu.concatenate %65, %67, %69, %71 in 2 : vector<1x8x32xbf16>, vector<1x8x32xbf16>, vector<1x8x32xbf16>, vector<1x8x32xbf16> -> vector<1x8x128xbf16>
    %73 = vector.shape_cast %72 : vector<1x8x128xbf16> to vector<8x128xbf16>
    %c0_13 = arith.constant 0 : index
    %c0_14 = arith.constant 0 : index
    %c0_15 = arith.constant 0 : index
    %74 = vector.load %arg5[%c0_13, %c0_14, %c0_15] : memref<1x128x128xbf16, #tpu.memory_space<vmem>>, vector<1x128x128xbf16>
    %75 = vector.shape_cast %74 : vector<1x128x128xbf16> to vector<128x128xbf16>
    %cst_16 = arith.constant dense<0.000000e+00> : vector<8x128xf32>
    %76 = tpu.matmul %73, %75, %cst_16 {dimension_numbers = #tpu.dot_dimension_numbers<[1], [0], [0], [1], [0, 0, 1, 1], [], []>} : vector<8x128xbf16>, vector<128x128xbf16>, vector<8x128xf32> -> vector<8x128xf32>
    %c0_17 = arith.constant 0 : index
    %c0_18 = arith.constant 0 : index
    %c0_19 = arith.constant 0 : index
    %77 = vector.load %arg6[%c0_17, %c0_18, %c0_19] : memref<1x1x128xf32, #tpu.memory_space<vmem>>, vector<1x1x128xf32>
    %78 = vector.shape_cast %77 : vector<1x1x128xf32> to vector<1x128xf32>
    %79 = vector.broadcast %78 : vector<1x128xf32> to vector<8x128xf32>
    %80 = arith.addf %76, %79 : vector<8x128xf32>
    %81 = arith.addf %80, %4 : vector<8x128xf32>
    %cst_20 = arith.constant dense<0.000000e+00> : vector<8xf32>
    %82 = vector.multi_reduction <add>, %81, %cst_20 [1] : vector<8x128xf32> to vector<8xf32>
    %83 = vector.shape_cast %82 : vector<8xf32> to vector<8x1xf32>
    %cst_21 = arith.constant 1.280000e+02 : f32
    %84 = vector.broadcast %cst_21 : f32 to vector<8x1xf32>
    %85 = arith.divf %83, %84 : vector<8x1xf32>
    %86 = vector.broadcast %85 : vector<8x1xf32> to vector<8x128xf32>
    %87 = arith.subf %81, %86 : vector<8x128xf32>
    %88 = arith.mulf %87, %87 : vector<8x128xf32>
    %cst_22 = arith.constant dense<0.000000e+00> : vector<8xf32>
    %89 = vector.multi_reduction <add>, %88, %cst_22 [1] : vector<8x128xf32> to vector<8xf32>
    %90 = vector.shape_cast %89 : vector<8xf32> to vector<8x1xf32>
    %cst_23 = arith.constant 1.280000e+02 : f32
    %91 = vector.broadcast %cst_23 : f32 to vector<8x1xf32>
    %92 = arith.divf %90, %91 : vector<8x1xf32>
    %93 = vector.broadcast %85 : vector<8x1xf32> to vector<8x128xf32>
    %94 = arith.subf %81, %93 : vector<8x128xf32>
    %cst_24 = arith.constant 9.99999974E-6 : f32
    %95 = vector.broadcast %cst_24 : f32 to vector<8x1xf32>
    %96 = arith.addf %92, %95 : vector<8x1xf32>
    %97 = math.rsqrt %96 : vector<8x1xf32>
    %98 = vector.broadcast %97 : vector<8x1xf32> to vector<8x128xf32>
    %99 = arith.mulf %94, %98 : vector<8x128xf32>
    %c0_25 = arith.constant 0 : index
    %c0_26 = arith.constant 0 : index
    %c0_27 = arith.constant 0 : index
    %100 = vector.load %arg7[%c0_25, %c0_26, %c0_27] : memref<1x1x128xf32, #tpu.memory_space<vmem>>, vector<1x1x128xf32>
    %101 = vector.shape_cast %100 : vector<1x1x128xf32> to vector<1x128xf32>
    %102 = vector.broadcast %101 : vector<1x128xf32> to vector<8x128xf32>
    %103 = arith.mulf %99, %102 : vector<8x128xf32>
    %c0_28 = arith.constant 0 : index
    %c0_29 = arith.constant 0 : index
    %c0_30 = arith.constant 0 : index
    %104 = vector.load %arg8[%c0_28, %c0_29, %c0_30] : memref<1x1x128xf32, #tpu.memory_space<vmem>>, vector<1x1x128xf32>
    %105 = vector.shape_cast %104 : vector<1x1x128xf32> to vector<1x128xf32>
    %106 = vector.broadcast %105 : vector<1x128xf32> to vector<8x128xf32>
    %107 = arith.addf %103, %106 : vector<8x128xf32>
    %108 = arith.truncf %107 : vector<8x128xf32> to vector<8x128xbf16>
    %c0_31 = arith.constant 0 : index
    %c0_32 = arith.constant 0 : index
    %c0_33 = arith.constant 0 : index
    %109 = vector.load %arg9[%c0_31, %c0_32, %c0_33] : memref<1x128x512xbf16, #tpu.memory_space<vmem>>, vector<1x128x512xbf16>
    %110 = vector.shape_cast %109 : vector<1x128x512xbf16> to vector<128x512xbf16>
    %cst_34 = arith.constant dense<0.000000e+00> : vector<8x512xf32>
    %111 = tpu.matmul %108, %110, %cst_34 {dimension_numbers = #tpu.dot_dimension_numbers<[1], [0], [0], [1], [0, 0, 1, 1], [], []>} : vector<8x128xbf16>, vector<128x512xbf16>, vector<8x512xf32> -> vector<8x512xf32>
    %c0_35 = arith.constant 0 : index
    %c0_36 = arith.constant 0 : index
    %c0_37 = arith.constant 0 : index
    %112 = vector.load %arg10[%c0_35, %c0_36, %c0_37] : memref<1x1x512xf32, #tpu.memory_space<vmem>>, vector<1x1x512xf32>
    %113 = vector.shape_cast %112 : vector<1x1x512xf32> to vector<1x512xf32>
    %114 = vector.broadcast %113 : vector<1x512xf32> to vector<8x512xf32>
    %115 = arith.addf %111, %114 : vector<8x512xf32>
    %cst_38 = arith.constant 0.000000e+00 : f32
    %116 = vector.broadcast %cst_38 : f32 to vector<8x512xf32>
    %117 = arith.maximumf %115, %116 : vector<8x512xf32>
    %118 = arith.truncf %117 : vector<8x512xf32> to vector<8x512xbf16>
    %c0_39 = arith.constant 0 : index
    %c0_40 = arith.constant 0 : index
    %c0_41 = arith.constant 0 : index
    %119 = vector.load %arg11[%c0_39, %c0_40, %c0_41] : memref<1x512x128xbf16, #tpu.memory_space<vmem>>, vector<1x512x128xbf16>
    %120 = vector.shape_cast %119 : vector<1x512x128xbf16> to vector<512x128xbf16>
    %cst_42 = arith.constant dense<0.000000e+00> : vector<8x128xf32>
    %121 = tpu.matmul %118, %120, %cst_42 {dimension_numbers = #tpu.dot_dimension_numbers<[1], [0], [0], [1], [0, 0, 1, 1], [], []>} : vector<8x512xbf16>, vector<512x128xbf16>, vector<8x128xf32> -> vector<8x128xf32>
    %c0_43 = arith.constant 0 : index
    %c0_44 = arith.constant 0 : index
    %c0_45 = arith.constant 0 : index
    %122 = vector.load %arg12[%c0_43, %c0_44, %c0_45] : memref<1x1x128xf32, #tpu.memory_space<vmem>>, vector<1x1x128xf32>
    %123 = vector.shape_cast %122 : vector<1x1x128xf32> to vector<1x128xf32>
    %124 = vector.broadcast %123 : vector<1x128xf32> to vector<8x128xf32>
    %125 = arith.addf %121, %124 : vector<8x128xf32>
    %126 = arith.addf %125, %107 : vector<8x128xf32>
    %cst_46 = arith.constant dense<0.000000e+00> : vector<8xf32>
    %127 = vector.multi_reduction <add>, %126, %cst_46 [1] : vector<8x128xf32> to vector<8xf32>
    %128 = vector.shape_cast %127 : vector<8xf32> to vector<8x1xf32>
    %cst_47 = arith.constant 1.280000e+02 : f32
    %129 = vector.broadcast %cst_47 : f32 to vector<8x1xf32>
    %130 = arith.divf %128, %129 : vector<8x1xf32>
    %131 = vector.broadcast %130 : vector<8x1xf32> to vector<8x128xf32>
    %132 = arith.subf %126, %131 : vector<8x128xf32>
    %133 = arith.mulf %132, %132 : vector<8x128xf32>
    %cst_48 = arith.constant dense<0.000000e+00> : vector<8xf32>
    %134 = vector.multi_reduction <add>, %133, %cst_48 [1] : vector<8x128xf32> to vector<8xf32>
    %135 = vector.shape_cast %134 : vector<8xf32> to vector<8x1xf32>
    %cst_49 = arith.constant 1.280000e+02 : f32
    %136 = vector.broadcast %cst_49 : f32 to vector<8x1xf32>
    %137 = arith.divf %135, %136 : vector<8x1xf32>
    %138 = vector.broadcast %130 : vector<8x1xf32> to vector<8x128xf32>
    %139 = arith.subf %126, %138 : vector<8x128xf32>
    %cst_50 = arith.constant 9.99999974E-6 : f32
    %140 = vector.broadcast %cst_50 : f32 to vector<8x1xf32>
    %141 = arith.addf %137, %140 : vector<8x1xf32>
    %142 = math.rsqrt %141 : vector<8x1xf32>
    %143 = vector.broadcast %142 : vector<8x1xf32> to vector<8x128xf32>
    %144 = arith.mulf %139, %143 : vector<8x128xf32>
    %c0_51 = arith.constant 0 : index
    %c0_52 = arith.constant 0 : index
    %c0_53 = arith.constant 0 : index
    %145 = vector.load %arg13[%c0_51, %c0_52, %c0_53] : memref<1x1x128xf32, #tpu.memory_space<vmem>>, vector<1x1x128xf32>
    %146 = vector.shape_cast %145 : vector<1x1x128xf32> to vector<1x128xf32>
    %147 = vector.broadcast %146 : vector<1x128xf32> to vector<8x128xf32>
    %148 = arith.mulf %144, %147 : vector<8x128xf32>
    %c0_54 = arith.constant 0 : index
    %c0_55 = arith.constant 0 : index
    %c0_56 = arith.constant 0 : index
    %149 = vector.load %arg14[%c0_54, %c0_55, %c0_56] : memref<1x1x128xf32, #tpu.memory_space<vmem>>, vector<1x1x128xf32>
    %150 = vector.shape_cast %149 : vector<1x1x128xf32> to vector<1x128xf32>
    %151 = vector.broadcast %150 : vector<1x128xf32> to vector<8x128xf32>
    %152 = arith.addf %148, %151 : vector<8x128xf32>
    %153 = vector.shape_cast %152 : vector<8x128xf32> to vector<1x8x128xf32>
    %c0_57 = arith.constant 0 : index
    %c0_58 = arith.constant 0 : index
    %c0_59 = arith.constant 0 : index
    %154 = vector.load %arg16[%c0_57, %c0_58, %c0_59] : memref<1x8x128xf32, #tpu.memory_space<vmem>>, vector<1x8x128xf32>
    tpu.vector_store %arg16[%c0_57, %c0_58, %c0_59], %153 {strides = array<i32>} : memref<1x8x128xf32, #tpu.memory_space<vmem>>, vector<1x8x128xf32>,
    %c0_60 = arith.constant 0 : index
    %c0_61 = arith.constant 0 : index
    %c0_62 = arith.constant 0 : index
    %155 = vector.load %arg15[%c0_60, %c0_61, %c0_62] : memref<1x8x128xf32, #tpu.memory_space<vmem>>, vector<1x8x128xf32>
    tpu.vector_store %arg15[%c0_60, %c0_61, %c0_62], %153 {strides = array<i32>} : memref<1x8x128xf32, #tpu.memory_space<vmem>>, vector<1x8x128xf32>,
    return
  }
  func.func @transform_0(%arg0: i32, %arg1: i32) -> (i32, i32, i32) {
    %c0_i32 = arith.constant 0 : i32
    %c0_i32_0 = arith.constant 0 : i32
    %c0_i32_1 = arith.constant 0 : i32
    return %arg0, %c0_i32, %c0_i32_0 : i32, i32, i32
  }
  func.func @transform_1(%arg0: i32, %arg1: i32) -> (i32, i32, i32) {
    %c0_i32 = arith.constant 0 : i32
    %c0_i32_0 = arith.constant 0 : i32
    %c0_i32_1 = arith.constant 0 : i32
    return %arg1, %c0_i32, %c0_i32_0 : i32, i32, i32
  }
  func.func @transform_2(%arg0: i32, %arg1: i32) -> (i32, i32, i32) {
    %c0_i32 = arith.constant 0 : i32
    %c0_i32_0 = arith.constant 0 : i32
    %c0_i32_1 = arith.constant 0 : i32
    return %arg1, %c0_i32, %c0_i32_0 : i32, i32, i32
  }
  func.func @transform_3(%arg0: i32, %arg1: i32) -> (i32, i32, i32) {
    %c0_i32 = arith.constant 0 : i32
    %c0_i32_0 = arith.constant 0 : i32
    %c0_i32_1 = arith.constant 0 : i32
    return %arg1, %c0_i32, %c0_i32_0 : i32, i32, i32
  }
  func.func @transform_4(%arg0: i32, %arg1: i32) -> (i32, i32, i32) {
    %c0_i32 = arith.constant 0 : i32
    %c0_i32_0 = arith.constant 0 : i32
    %c0_i32_1 = arith.constant 0 : i32
    return %arg1, %c0_i32, %c0_i32_0 : i32, i32, i32
  }
  func.func @transform_5(%arg0: i32, %arg1: i32) -> (i32, i32, i32) {
    %c0_i32 = arith.constant 0 : i32
    %c0_i32_0 = arith.constant 0 : i32
    %c0_i32_1 = arith.constant 0 : i32
    return %arg1, %c0_i32, %c0_i32_0 : i32, i32, i32
  }
  func.func @transform_6(%arg0: i32, %arg1: i32) -> (i32, i32, i32) {
    %c0_i32 = arith.constant 0 : i32
    %c0_i32_0 = arith.constant 0 : i32
    %c0_i32_1 = arith.constant 0 : i32
    return %arg1, %c0_i32, %c0_i32_0 : i32, i32, i32
  }
  func.func @transform_7(%arg0: i32, %arg1: i32) -> (i32, i32, i32) {
    %c0_i32 = arith.constant 0 : i32
    %c0_i32_0 = arith.constant 0 : i32
    %c0_i32_1 = arith.constant 0 : i32
    return %arg1, %c0_i32, %c0_i32_0 : i32, i32, i32
  }
  func.func @transform_8(%arg0: i32, %arg1: i32) -> (i32, i32, i32) {
    %c0_i32 = arith.constant 0 : i32
    %c0_i32_0 = arith.constant 0 : i32
    %c0_i32_1 = arith.constant 0 : i32
    return %arg1, %c0_i32, %c0_i32_0 : i32, i32, i32
  }
  func.func @transform_9(%arg0: i32, %arg1: i32) -> (i32, i32, i32) {
    %c0_i32 = arith.constant 0 : i32
    %c0_i32_0 = arith.constant 0 : i32
    %c0_i32_1 = arith.constant 0 : i32
    return %arg1, %c0_i32, %c0_i32_0 : i32, i32, i32
  }
  func.func @transform_10(%arg0: i32, %arg1: i32) -> (i32, i32, i32) {
    %c0_i32 = arith.constant 0 : i32
    %c0_i32_0 = arith.constant 0 : i32
    %c0_i32_1 = arith.constant 0 : i32
    return %arg1, %c0_i32, %c0_i32_0 : i32, i32, i32
  }
  func.func @transform_11(%arg0: i32, %arg1: i32) -> (i32, i32, i32) {
    %c0_i32 = arith.constant 0 : i32
    %c0_i32_0 = arith.constant 0 : i32
    %c0_i32_1 = arith.constant 0 : i32
    return %arg1, %c0_i32, %c0_i32_0 : i32, i32, i32
  }
  func.func @transform_12(%arg0: i32, %arg1: i32) -> (i32, i32, i32) {
    %c0_i32 = arith.constant 0 : i32
    %c0_i32_0 = arith.constant 0 : i32
    %c0_i32_1 = arith.constant 0 : i32
    return %arg1, %c0_i32, %c0_i32_0 : i32, i32, i32
  }
  func.func @transform_13(%arg0: i32, %arg1: i32) -> (i32, i32, i32) {
    %c0_i32 = arith.constant 0 : i32
    %c0_i32_0 = arith.constant 0 : i32
    return %arg0, %arg1, %c0_i32 : i32, i32, i32
  }
}

</mosaic_0001>

<llo_original>
// kernel: tpu_custom_call.1
$region0: #{tpu_custom_call.1}
  #allocation0 [shape = 'u32[]', space=smem, size = 0x4, offset = 0x4, fixed_abs, tag = 'smem constant byte address 0x4 - core index']
  #allocation1 [shape = 'u32[72,128]{1,0:T(1,128)}', space=vmem, size = 0x9000, scoped, tag = 'internal scratch']
  #allocation2 [shape = 'f32[1,8,128]{2,1,0:T(8,128)}', space=vmem, size = 0x1000, scoped, tag = 'scratch operand']
  %s0 = inlined_call_operand.hbm [shape: f32[2,8,128], index: 0, kind: input, shape index: {}]
  %s1 = inlined_call_operand.hbm [shape: bf16[2,128,384], index: 1, kind: input, shape index: {}]
  %s2 = inlined_call_operand.hbm [shape: f32[2,1,384], index: 2, kind: input, shape index: {}]
  %s3 = inlined_call_operand.hbm [shape: bf16[2,128,128], index: 3, kind: input, shape index: {}]
  %s4 = inlined_call_operand.vmem [shape: f32[2,1,128], index: 4, kind: input, shape index: {}]
  %s5 = inlined_call_operand.vmem [shape: f32[2,1,128], index: 5, kind: input, shape index: {}]
  %s6 = inlined_call_operand.hbm [shape: f32[2,1,128], index: 6, kind: input, shape index: {}]
  %s7 = inlined_call_operand.hbm [shape: bf16[2,128,512], index: 7, kind: input, shape index: {}]
  %s8 = inlined_call_operand.hbm [shape: f32[2,1,512], index: 8, kind: input, shape index: {}]
  %s9 = inlined_call_operand.hbm [shape: bf16[2,512,128], index: 9, kind: input, shape index: {}]
  %s10 = inlined_call_operand.vmem [shape: f32[2,1,128], index: 10, kind: input, shape index: {}]
  %s11 = inlined_call_operand.vmem [shape: f32[2,1,128], index: 11, kind: input, shape index: {}]
  %s12 = inlined_call_operand.vmem [shape: f32[2,1,128], index: 12, kind: input, shape index: {}]
  %s13 = inlined_call_operand.hbm [shape: f32[2,16,128], index: 13, kind: output, shape index: {}]
  %s14 = sld [smem:[#allocation0]]
  $region121: #{tpu_custom_call.1} parent=0
    _
  %s16 = ssub.s32 1, %s14
  %s17 = scalar_select 0, %s16, %s14
  $region1: #{tpu_custom_call.1} parent=0
    #allocation3 [shape = 'u8[8192]{0}', space=vmem, size = 0x2000, scoped, tag = 'input window, operand 0']
    #allocation4 [shape = 's32[2]{0}', space=sflag, size = 0x8, scoped, tag = 'scoped memory for tpu_custom_call.1']
    #allocation5 [shape = 's32[2]{0}', space=sflag, size = 0x8, scoped, tag = 'scoped memory for tpu_custom_call.1']
    #allocation6 [shape = 'u8[196608]{0}', space=vmem, size = 0x30000, scoped, tag = 'input window, operand 1']
    #allocation7 [shape = 's32[2]{0}', space=sflag, size = 0x8, scoped, tag = 'scoped memory for tpu_custom_call.1']
    #allocation8 [shape = 'u8[3072]{0}', space=vmem, size = 0xc00, scoped, tag = 'input window, operand 2']
    #allocation9 [shape = 'u8[65536]{0}', space=vmem, size = 0x10000, scoped, tag = 'input window, operand 3']
    #allocation10 [shape = 's32[2]{0}', space=sflag, size = 0x8, scoped, tag = 'scoped memory for tpu_custom_call.1']
    #allocation11 [shape = 'u8[1024]{0}', space=vmem, size = 0x400, scoped, tag = 'input window, operand 6']
    #allocation12 [shape = 'u8[262144]{0}', space=vmem, size = 0x40000, scoped, tag = 'input window, operand 7']
    #allocation13 [shape = 's32[2]{0}', space=sflag, size = 0x8, scoped, tag = 'scoped memory for tpu_custom_call.1']
    #allocation14 [shape = 'u8[4096]{0}', space=vmem, size = 0x1000, scoped, tag = 'input window, operand 8']
    #allocation15 [shape = 'u8[262144]{0}', space=vmem, size = 0x40000, scoped, tag = 'input window, operand 9']
    #allocation16 [shape = 's32[2]{0}', space=sflag, size = 0x8, scoped, tag = 'scoped memory for tpu_custom_call.1']
    #allocation17 [shape = 'u8[8192]{0}', space=vmem, size = 0x2000, scoped, tag = 'output window, operand 0']
    %18 = vsyncpa [#allocation4], 0
    %s19 = scalar_lea.sflag [#allocation4], 1
    %20 = vsyncpa %s19, 0
    %21 = vsyncpa [#allocation7], 0
    %s22 = scalar_lea.sflag [#allocation7], 1
    %23 = vsyncpa %s22, 0
    %24 = vsyncpa [#allocation10], 0
    %s25 = scalar_lea.sflag [#allocation10], 1
    %26 = vsyncpa %s25, 0
    %27 = vsyncpa [#allocation13], 0
    %s28 = scalar_lea.sflag [#allocation13], 1
    %29 = vsyncpa %s28, 0
    %30 = vsyncpa [#allocation16], 0
    %s31 = scalar_lea.sflag [#allocation16], 1
    %32 = vsyncpa %s31, 0
    %33 = vsyncpa [#allocation5], 0
    %s34 = scalar_lea.sflag [#allocation5], 1
    %35 = vsyncpa %s34, 0
    loop: start=0, step=1, limit=6
    $region2: #{tpu_custom_call.1} parent=1 // loop_pre_header
      _
    $region3: #{tpu_custom_call.1} parent=1 // loop_header
      %s37 = sphi 0, %s41
      %p38 = scmp.ge.s32.totalorder %s37, 6
      %s44 = sphi 0, %s56
      %s45 = sphi 0, %s52
      %s46 = sphi 0, %s44
      %s47 = sphi 0, %s45
      %s48 = sphi 0, %s46
      %s49 = sphi 0, %s47
      %s59 = sphi 0, %s61
      %s62 = sphi 0, %s59
      %s63 = sphi 0, %s62
      %s79 = sphi 0, %s63
      %s85 = sphi 0, %s87
      %s88 = sphi 0, %s85
      %s89 = sphi 0, %s88
      %s105 = sphi 0, %s89
      %s111 = sphi 0, %s113
      %s114 = sphi 0, %s111
      %s115 = sphi 0, %s114
      %s131 = sphi 0, %s115
      %s137 = sphi 0, %s139
      %s140 = sphi 0, %s137
      %s141 = sphi 0, %s140
      %s157 = sphi 0, %s141
      %s163 = sphi 0, %s165
      %s166 = sphi 0, %s163
      %s167 = sphi 0, %s166
      %s183 = sphi 0, %s167
      %s189 = sphi 0, %s191
      %s192 = sphi 0, %s189
      %s193 = sphi 0, %s192
      %s209 = sphi 0, %s193
      %s215 = sphi 0, %s217
      %s218 = sphi 0, %s215
      %s219 = sphi 0, %s218
      %s235 = sphi 0, %s219
      %s241 = sphi 0, %s243
      %s244 = sphi 0, %s241
      %s245 = sphi 0, %s244
      %s261 = sphi 0, %s245
      %s267 = sphi 0, %s269
      %s270 = sphi 0, %s267
      %s271 = sphi 0, %s270
      %s287 = sphi 0, %s271
      %s293 = sphi 0, %s295
      %s296 = sphi 0, %s293
      %s297 = sphi 0, %s296
      %s313 = sphi 0, %s297
      %s319 = sphi 0, %s321
      %s322 = sphi 0, %s319
      %s323 = sphi 0, %s322
      %s339 = sphi 0, %s323
      %s345 = sphi 0, %s347
      %s348 = sphi 0, %s345
      %s349 = sphi 0, %s348
      %s365 = sphi 0, %s349
      %s371 = sphi 0, %s373
      %s374 = sphi 0, %s371
      %s375 = sphi 0, %s374
      %s391 = sphi 0, %s375
      %s399 = sphi 0, %s401
      %s402 = sphi 0, %s399
      %s403 = sphi 0, %s402
      %s419 = sphi 0, %s403
    $region4: #{tpu_custom_call.1} parent=1 // loop_header_branch
      %40 = sbr.rel (%p38) target = $region8
    $region5: #{tpu_custom_call.1} parent=1 // loop_body
      %s42 = ssub.s32 %s37, 1
      %s43 = ssub.s32 %s37, 2
      %s50 = sadd.s32 1, %s45
      %p51 = scmp.ge.s32.totalorder %s50, 2
      %s52 = scalar_select %p51, 0, %s50
      %s53 = sadd.s32 1, %s44
      %s54 = scalar_select %p51, %s53, %s44
      %p55 = scmp.ge.s32.totalorder %s54, 2
      %s56 = scalar_select %p55, 0, %s54
      %s57 = ssub.s32 %s44, %s56
      %p58 = scmp.eq.s32.totalorder %s57, 0
      %s60 = sadd.s32 %s59, 1
      %s61 = scalar_select %p58, %s59, %s60
      %p64 = pneg %p58
      %p65 = scmp.eq.s32.totalorder %s37, 3
      %p66 = por %p64, %p65
      %p67 = scmp.ne.s32.totalorder %s59, %s62
      %p68 = scmp.eq.s32.totalorder %s37, 0
      %p69 = por %p67, %p68
      %p70 = scmp.ne.s32.totalorder %s59, %s62
      %p71 = scmp.eq.s32.totalorder %s42, 3
      %p72 = por %p70, %p71
      %p73 = scmp.ne.s32.totalorder %s62, %s63
      %p74 = scmp.eq.s32.totalorder %s42, 0
      %p75 = por %p73, %p74
      %p76 = scmp.ne.s32.totalorder %s62, %s63
      %p77 = scmp.eq.s32.totalorder %s43, 3
      %p78 = por %p76, %p77
      %p80 = scmp.ne.s32.totalorder %s63, %s79
      %p81 = scmp.eq.s32.totalorder %s43, 0
      %p82 = por %p80, %p81
      %s83 = ssub.s32 %s45, %s52
      %p84 = scmp.eq.s32.totalorder %s83, 0
      %s86 = sadd.s32 %s85, 1
      %s87 = scalar_select %p84, %s85, %s86
      %p90 = pneg %p84
      %p91 = scmp.eq.s32.totalorder %s37, 3
      %p92 = por %p90, %p91
      %p93 = scmp.ne.s32.totalorder %s85, %s88
      %p94 = scmp.eq.s32.totalorder %s37, 0
      %p95 = por %p93, %p94
      %p96 = scmp.ne.s32.totalorder %s85, %s88
      %p97 = scmp.eq.s32.totalorder %s42, 3
      %p98 = por %p96, %p97
      %p99 = scmp.ne.s32.totalorder %s88, %s89
      %p100 = scmp.eq.s32.totalorder %s42, 0
      %p101 = por %p99, %p100
      %p102 = scmp.ne.s32.totalorder %s88, %s89
      %p103 = scmp.eq.s32.totalorder %s43, 3
      %p104 = por %p102, %p103
      %p106 = scmp.ne.s32.totalorder %s89, %s105
      %p107 = scmp.eq.s32.totalorder %s43, 0
      %p108 = por %p106, %p107
      %s109 = ssub.s32 %s45, %s52
      %p110 = scmp.eq.s32.totalorder %s109, 0
      %s112 = sadd.s32 %s111, 1
      %s113 = scalar_select %p110, %s111, %s112
      %p116 = pneg %p110
      %p117 = scmp.eq.s32.totalorder %s37, 3
      %p118 = por %p116, %p117
      %p119 = scmp.ne.s32.totalorder %s111, %s114
      %p120 = scmp.eq.s32.totalorder %s37, 0
      %p121 = por %p119, %p120
      %p122 = scmp.ne.s32.totalorder %s111, %s114
      %p123 = scmp.eq.s32.totalorder %s42, 3
      %p124 = por %p122, %p123
      %p125 = scmp.ne.s32.totalorder %s114, %s115
      %p126 = scmp.eq.s32.totalorder %s42, 0
      %p127 = por %p125, %p126
      %p128 = scmp.ne.s32.totalorder %s114, %s115
      %p129 = scmp.eq.s32.totalorder %s43, 3
      %p130 = por %p128, %p129
      %p132 = scmp.ne.s32.totalorder %s115, %s131
      %p133 = scmp.eq.s32.totalorder %s43, 0
      %p134 = por %p132, %p133
      %s135 = ssub.s32 %s45, %s52
      %p136 = scmp.eq.s32.totalorder %s135, 0
      %s138 = sadd.s32 %s137, 1
      %s139 = scalar_select %p136, %s137, %s138
      %p142 = pneg %p136
      %p143 = scmp.eq.s32.totalorder %s37, 3
      %p144 = por %p142, %p143
      %p145 = scmp.ne.s32.totalorder %s137, %s140
      %p146 = scmp.eq.s32.totalorder %s37, 0
      %p147 = por %p145, %p146
      %p148 = scmp.ne.s32.totalorder %s137, %s140
      %p149 = scmp.eq.s32.totalorder %s42, 3
      %p150 = por %p148, %p149
      %p151 = scmp.ne.s32.totalorder %s140, %s141
      %p152 = scmp.eq.s32.totalorder %s42, 0
      %p153 = por %p151, %p152
      %p154 = scmp.ne.s32.totalorder %s140, %s141
      %p155 = scmp.eq.s32.totalorder %s43, 3
      %p156 = por %p154, %p155
      %p158 = scmp.ne.s32.totalorder %s141, %s157
      %p159 = scmp.eq.s32.totalorder %s43, 0
      %p160 = por %p158, %p159
      %s161 = ssub.s32 %s45, %s52
      %p162 = scmp.eq.s32.totalorder %s161, 0
      %s164 = sadd.s32 %s163, 1
      %s165 = scalar_select %p162, %s163, %s164
      %p168 = pneg %p162
      %p169 = scmp.eq.s32.totalorder %s37, 3
      %p170 = por %p168, %p169
      %p171 = scmp.ne.s32.totalorder %s163, %s166
      %p172 = scmp.eq.s32.totalorder %s37, 0
      %p173 = por %p171, %p172
      %p174 = scmp.ne.s32.totalorder %s163, %s166
      %p175 = scmp.eq.s32.totalorder %s42, 3
      %p176 = por %p174, %p175
      %p177 = scmp.ne.s32.totalorder %s166, %s167
      %p178 = scmp.eq.s32.totalorder %s42, 0
      %p179 = por %p177, %p178
      %p180 = scmp.ne.s32.totalorder %s166, %s167
      %p181 = scmp.eq.s32.totalorder %s43, 3
      %p182 = por %p180, %p181
      %p184 = scmp.ne.s32.totalorder %s167, %s183
      %p185 = scmp.eq.s32.totalorder %s43, 0
      %p186 = por %p184, %p185
      %s187 = ssub.s32 %s45, %s52
      %p188 = scmp.eq.s32.totalorder %s187, 0
      %s190 = sadd.s32 %s189, 1
      %s191 = scalar_select %p188, %s189, %s190
      %p194 = pneg %p188
      %p195 = scmp.eq.s32.totalorder %s37, 3
      %p196 = por %p194, %p195
      %p197 = scmp.ne.s32.totalorder %s189, %s192
      %p198 = scmp.eq.s32.totalorder %s37, 0
      %p199 = por %p197, %p198
      %p200 = scmp.ne.s32.totalorder %s189, %s192
      %p201 = scmp.eq.s32.totalorder %s42, 3
      %p202 = por %p200, %p201
      %p203 = scmp.ne.s32.totalorder %s192, %s193
      %p204 = scmp.eq.s32.totalorder %s42, 0
      %p205 = por %p203, %p204
      %p206 = scmp.ne.s32.totalorder %s192, %s193
      %p207 = scmp.eq.s32.totalorder %s43, 3
      %p208 = por %p206, %p207
      %p210 = scmp.ne.s32.totalorder %s193, %s209
      %p211 = scmp.eq.s32.totalorder %s43, 0
      %p212 = por %p210, %p211
      %s213 = ssub.s32 %s45, %s52
      %p214 = scmp.eq.s32.totalorder %s213, 0
      %s216 = sadd.s32 %s215, 1
      %s217 = scalar_select %p214, %s215, %s216
      %p220 = pneg %p214
      %p221 = scmp.eq.s32.totalorder %s37, 3
      %p222 = por %p220, %p221
      %p223 = scmp.ne.s32.totalorder %s215, %s218
      %p224 = scmp.eq.s32.totalorder %s37, 0
      %p225 = por %p223, %p224
      %p226 = scmp.ne.s32.totalorder %s215, %s218
      %p227 = scmp.eq.s32.totalorder %s42, 3
      %p228 = por %p226, %p227
      %p229 = scmp.ne.s32.totalorder %s218, %s219
      %p230 = scmp.eq.s32.totalorder %s42, 0
      %p231 = por %p229, %p230
      %p232 = scmp.ne.s32.totalorder %s218, %s219
      %p233 = scmp.eq.s32.totalorder %s43, 3
      %p234 = por %p232, %p233
      %p236 = scmp.ne.s32.totalorder %s219, %s235
      %p237 = scmp.eq.s32.totalorder %s43, 0
      %p238 = por %p236, %p237
      %s239 = ssub.s32 %s45, %s52
      %p240 = scmp.eq.s32.totalorder %s239, 0
      %s242 = sadd.s32 %s241, 1
      %s243 = scalar_select %p240, %s241, %s242
      %p246 = pneg %p240
      %p247 = scmp.eq.s32.totalorder %s37, 3
      %p248 = por %p246, %p247
      %p249 = scmp.ne.s32.totalorder %s241, %s244
      %p250 = scmp.eq.s32.totalorder %s37, 0
      %p251 = por %p249, %p250
      %p252 = scmp.ne.s32.totalorder %s241, %s244
      %p253 = scmp.eq.s32.totalorder %s42, 3
      %p254 = por %p252, %p253
      %p255 = scmp.ne.s32.totalorder %s244, %s245
      %p256 = scmp.eq.s32.totalorder %s42, 0
      %p257 = por %p255, %p256
      %p258 = scmp.ne.s32.totalorder %s244, %s245
      %p259 = scmp.eq.s32.totalorder %s43, 3
      %p260 = por %p258, %p259
      %p262 = scmp.ne.s32.totalorder %s245, %s261
      %p263 = scmp.eq.s32.totalorder %s43, 0
      %p264 = por %p262, %p263
      %s265 = ssub.s32 %s45, %s52
      %p266 = scmp.eq.s32.totalorder %s265, 0
      %s268 = sadd.s32 %s267, 1
      %s269 = scalar_select %p266, %s267, %s268
      %p272 = pneg %p266
      %p273 = scmp.eq.s32.totalorder %s37, 3
      %p274 = por %p272, %p273
      %p275 = scmp.ne.s32.totalorder %s267, %s270
      %p276 = scmp.eq.s32.totalorder %s37, 0
      %p277 = por %p275, %p276
      %p278 = scmp.ne.s32.totalorder %s267, %s270
      %p279 = scmp.eq.s32.totalorder %s42, 3
      %p280 = por %p278, %p279
      %p281 = scmp.ne.s32.totalorder %s270, %s271
      %p282 = scmp.eq.s32.totalorder %s42, 0
      %p283 = por %p281, %p282
      %p284 = scmp.ne.s32.totalorder %s270, %s271
      %p285 = scmp.eq.s32.totalorder %s43, 3
      %p286 = por %p284, %p285
      %p288 = scmp.ne.s32.totalorder %s271, %s287
      %p289 = scmp.eq.s32.totalorder %s43, 0
      %p290 = por %p288, %p289
      %s291 = ssub.s32 %s45, %s52
      %p292 = scmp.eq.s32.totalorder %s291, 0
      %s294 = sadd.s32 %s293, 1
      %s295 = scalar_select %p292, %s293, %s294
      %p298 = pneg %p292
      %p299 = scmp.eq.s32.totalorder %s37, 3
      %p300 = por %p298, %p299
      %p301 = scmp.ne.s32.totalorder %s293, %s296
      %p302 = scmp.eq.s32.totalorder %s37, 0
      %p303 = por %p301, %p302
      %p304 = scmp.ne.s32.totalorder %s293, %s296
      %p305 = scmp.eq.s32.totalorder %s42, 3
      %p306 = por %p304, %p305
      %p307 = scmp.ne.s32.totalorder %s296, %s297
      %p308 = scmp.eq.s32.totalorder %s42, 0
      %p309 = por %p307, %p308
      %p310 = scmp.ne.s32.totalorder %s296, %s297
      %p311 = scmp.eq.s32.totalorder %s43, 3
      %p312 = por %p310, %p311
      %p314 = scmp.ne.s32.totalorder %s297, %s313
      %p315 = scmp.eq.s32.totalorder %s43, 0
      %p316 = por %p314, %p315
      %s317 = ssub.s32 %s45, %s52
      %p318 = scmp.eq.s32.totalorder %s317, 0
      %s320 = sadd.s32 %s319, 1
      %s321 = scalar_select %p318, %s319, %s320
      %p324 = pneg %p318
      %p325 = scmp.eq.s32.totalorder %s37, 3
      %p326 = por %p324, %p325
      %p327 = scmp.ne.s32.totalorder %s319, %s322
      %p328 = scmp.eq.s32.totalorder %s37, 0
      %p329 = por %p327, %p328
      %p330 = scmp.ne.s32.totalorder %s319, %s322
      %p331 = scmp.eq.s32.totalorder %s42, 3
      %p332 = por %p330, %p331
      %p333 = scmp.ne.s32.totalorder %s322, %s323
      %p334 = scmp.eq.s32.totalorder %s42, 0
      %p335 = por %p333, %p334
      %p336 = scmp.ne.s32.totalorder %s322, %s323
      %p337 = scmp.eq.s32.totalorder %s43, 3
      %p338 = por %p336, %p337
      %p340 = scmp.ne.s32.totalorder %s323, %s339
      %p341 = scmp.eq.s32.totalorder %s43, 0
      %p342 = por %p340, %p341
      %s343 = ssub.s32 %s45, %s52
      %p344 = scmp.eq.s32.totalorder %s343, 0
      %s346 = sadd.s32 %s345, 1
      %s347 = scalar_select %p344, %s345, %s346
      %p350 = pneg %p344
      %p351 = scmp.eq.s32.totalorder %s37, 3
      %p352 = por %p350, %p351
      %p353 = scmp.ne.s32.totalorder %s345, %s348
      %p354 = scmp.eq.s32.totalorder %s37, 0
      %p355 = por %p353, %p354
      %p356 = scmp.ne.s32.totalorder %s345, %s348
      %p357 = scmp.eq.s32.totalorder %s42, 3
      %p358 = por %p356, %p357
      %p359 = scmp.ne.s32.totalorder %s348, %s349
      %p360 = scmp.eq.s32.totalorder %s42, 0
      %p361 = por %p359, %p360
      %p362 = scmp.ne.s32.totalorder %s348, %s349
      %p363 = scmp.eq.s32.totalorder %s43, 3
      %p364 = por %p362, %p363
      %p366 = scmp.ne.s32.totalorder %s349, %s365
      %p367 = scmp.eq.s32.totalorder %s43, 0
      %p368 = por %p366, %p367
      %s369 = ssub.s32 %s45, %s52
      %p370 = scmp.eq.s32.totalorder %s369, 0
      %s372 = sadd.s32 %s371, 1
      %s373 = scalar_select %p370, %s371, %s372
      %p376 = pneg %p370
      %p377 = scmp.eq.s32.totalorder %s37, 3
      %p378 = por %p376, %p377
      %p379 = scmp.ne.s32.totalorder %s371, %s374
      %p380 = scmp.eq.s32.totalorder %s37, 0
      %p381 = por %p379, %p380
      %p382 = scmp.ne.s32.totalorder %s371, %s374
      %p383 = scmp.eq.s32.totalorder %s42, 3
      %p384 = por %p382, %p383
      %p385 = scmp.ne.s32.totalorder %s374, %s375
      %p386 = scmp.eq.s32.totalorder %s42, 0
      %p387 = por %p385, %p386
      %p388 = scmp.ne.s32.totalorder %s374, %s375
      %p389 = scmp.eq.s32.totalorder %s43, 3
      %p390 = por %p388, %p389
      %p392 = scmp.ne.s32.totalorder %s375, %s391
      %p393 = scmp.eq.s32.totalorder %s43, 0
      %p394 = por %p392, %p393
      %s395 = ssub.s32 %s44, %s56
      %s396 = ssub.s32 %s45, %s52
      %s397 = sor.u32 %s395, %s396
      %p398 = scmp.eq.s32.totalorder %s397, 0
      %s400 = sadd.s32 %s399, 1
      %s401 = scalar_select %p398, %s399, %s400
      %p404 = pneg %p398
      %p405 = scmp.eq.s32.totalorder %s37, 3
      %p406 = por %p404, %p405
      %p407 = scmp.ne.s32.totalorder %s399, %s402
      %p408 = scmp.eq.s32.totalorder %s37, 0
      %p409 = por %p407, %p408
      %p410 = scmp.ne.s32.totalorder %s399, %s402
      %p411 = scmp.eq.s32.totalorder %s42, 3
      %p412 = por %p410, %p411
      %p413 = scmp.ne.s32.totalorder %s402, %s403
      %p414 = scmp.eq.s32.totalorder %s42, 0
      %p415 = por %p413, %p414
      %p416 = scmp.ne.s32.totalorder %s402, %s403
      %p417 = scmp.eq.s32.totalorder %s43, 3
      %p418 = por %p416, %p417
      %p420 = scmp.ne.s32.totalorder %s403, %s419
      %p421 = scmp.eq.s32.totalorder %s43, 0
      %p422 = por %p420, %p421
      %p423 = scmp.le.s32.totalorder 1, %s37
      %p424 = scmp.lt.s32.totalorder %s37, 5
      %p425 = pnand %p423, %p424
      %p426 = pneg %p425
      // Predicated region
      $region9: #{tpu_custom_call.1} parent=5 // pred_check
        _
      $region10: #{tpu_custom_call.1} parent=5 // pred_check_branch
        %428 = sbr.rel (%p425) target = $region12
      $region11: #{tpu_custom_call.1} parent=5 // pred_region
        %s429 = ssub.s32 %s37, 1
      $region12: #{tpu_custom_call.1} parent=5 // pred_fallthru
        _
      %p430 = scmp.lt.s32.totalorder %s37, 4
      // Predicated region
      $region13: #{tpu_custom_call.1} parent=5 // pred_check
        %p431 = pneg %p430
      $region14: #{tpu_custom_call.1} parent=5 // pred_check_branch
        %433 = sbr.rel (%p431) target = $region16
      $region15: #{tpu_custom_call.1} parent=5 // pred_region
        // Predicated region
        $region17: #{tpu_custom_call.1} parent=15 // pred_check
          %p434 = pneg %p69
        $region18: #{tpu_custom_call.1} parent=15 // pred_check_branch
          %436 = sbr.rel (%p434) target = $region20
        $region19: #{tpu_custom_call.1} parent=15 // pred_region
          %s437 = sand.u32 %s59, 1
          %s438 = scalar_lea.sflag [#allocation4], %s437
          %s439 = sand.u32 %s59, 1
          %s440 = smul.addr %s439, 8
          %s441 = scalar_lea.vmem [#allocation3], %s440
          %443 = vsyncadd %s438, 0
          %s444 = smul.addr %s44, 8
          %s445 = scalar_lea.hbm %s0, %s444
          %s447 = sshll.u32 %s445, 4
          %s448 = int_to_ptr.hbm [resolvable:$true] %s447
          %s449 = sshll.u32 %s441, 4
          %s450 = int_to_ptr.vmem [resolvable:$true] %s449
          %452 = dma.hbm_to_vmem [thread:$0]  %s448, 128, %s450, %s438
        $region20: #{tpu_custom_call.1} parent=15 // pred_fallthru
          _
        // Predicated region
        $region21: #{tpu_custom_call.1} parent=15 // pred_check
          %p453 = pneg %p95
        $region22: #{tpu_custom_call.1} parent=15 // pred_check_branch
          %455 = sbr.rel (%p453) target = $region24
        $region23: #{tpu_custom_call.1} parent=15 // pred_region
          %s456 = sand.u32 %s37, 1
          %s457 = scalar_lea.sflag [#allocation7], %s456
          %s458 = sand.u32 %s85, 1
          %s459 = smul.addr %s458, 192
          %s460 = scalar_lea.vmem [#allocation6], %s459
          %462 = vsyncadd %s457, 0
          %s463 = smul.addr %s45, 48
          %s464 = smul.addr %s463, 4
          %s465 = scalar_lea.hbm %s1, %s464
          %s466 = sshll.u32 %s465, 4
          %s467 = int_to_ptr.hbm [resolvable:$true] %s466
          %s468 = sshll.u32 %s460, 4
          %s469 = int_to_ptr.vmem [resolvable:$true] %s468
          %474 = dma.hbm_to_vmem [thread:$0]  %s467, 3072, %s469, %s457, 192, 192, 12
        $region24: #{tpu_custom_call.1} parent=15 // pred_fallthru
          _
        // Predicated region
        $region25: #{tpu_custom_call.1} parent=15 // pred_check
          %p475 = pneg %p121
        $region26: #{tpu_custom_call.1} parent=15 // pred_check_branch
          %477 = sbr.rel (%p475) target = $region28
        $region27: #{tpu_custom_call.1} parent=15 // pred_region
          %s478 = sand.u32 %s37, 1
          %s479 = scalar_lea.sflag [#allocation7], %s478
          %s480 = sand.u32 %s111, 1
          %s481 = smul.addr %s480, 3
          %s482 = scalar_lea.vmem [#allocation8], %s481
          %484 = vsyncadd %s479, 0
          %s485 = smul.addr %s45, 3
          %s486 = scalar_lea.hbm %s2, %s485
          %s488 = sshll.u32 %s486, 4
          %s489 = int_to_ptr.hbm [resolvable:$true] %s488
          %s490 = sshll.u32 %s482, 4
          %s491 = int_to_ptr.vmem [resolvable:$true] %s490
          %493 = dma.hbm_to_vmem [thread:$0]  %s489, 48, %s491, %s479
        $region28: #{tpu_custom_call.1} parent=15 // pred_fallthru
          _
        // Predicated region
        $region29: #{tpu_custom_call.1} parent=15 // pred_check
          %p494 = pneg %p147
        $region30: #{tpu_custom_call.1} parent=15 // pred_check_branch
          %496 = sbr.rel (%p494) target = $region32
        $region31: #{tpu_custom_call.1} parent=15 // pred_region
          %s497 = sand.u32 %s37, 1
          %s498 = scalar_lea.sflag [#allocation10], %s497
          %s499 = sand.u32 %s137, 1
          %s500 = smul.addr %s499, 64
          %s501 = scalar_lea.vmem [#allocation9], %s500
          %503 = vsyncadd %s498, 0
          %s504 = smul.addr %s45, 16
          %s505 = smul.addr %s504, 4
          %s506 = scalar_lea.hbm %s3, %s505
          %s507 = sshll.u32 %s506, 4
          %s508 = int_to_ptr.hbm [resolvable:$true] %s507
          %s509 = sshll.u32 %s501, 4
          %s510 = int_to_ptr.vmem [resolvable:$true] %s509
          %515 = dma.hbm_to_vmem [thread:$0]  %s508, 1024, %s510, %s498, 64, 64, 4
        $region32: #{tpu_custom_call.1} parent=15 // pred_fallthru
          _
        // Predicated region
        $region33: #{tpu_custom_call.1} parent=15 // pred_check
          %p516 = pneg %p173
        $region34: #{tpu_custom_call.1} parent=15 // pred_check_branch
          %518 = sbr.rel (%p516) target = $region36
        $region35: #{tpu_custom_call.1} parent=15 // pred_region
          %p519 = scmp.lt.s32.totalorder %s45, 1
          %s520 = scalar_select %p519, %s45, 1
          %s521 = scalar_lea.vmem %s4, %s520
        $region36: #{tpu_custom_call.1} parent=15 // pred_fallthru
          _
        // Predicated region
        $region37: #{tpu_custom_call.1} parent=15 // pred_check
          %p522 = pneg %p199
        $region38: #{tpu_custom_call.1} parent=15 // pred_check_branch
          %524 = sbr.rel (%p522) target = $region40
        $region39: #{tpu_custom_call.1} parent=15 // pred_region
          %p525 = scmp.lt.s32.totalorder %s45, 1
          %s526 = scalar_select %p525, %s45, 1
          %s527 = scalar_lea.vmem %s5, %s526
        $region40: #{tpu_custom_call.1} parent=15 // pred_fallthru
          _
        // Predicated region
        $region41: #{tpu_custom_call.1} parent=15 // pred_check
          %p528 = pneg %p225
        $region42: #{tpu_custom_call.1} parent=15 // pred_check_branch
          %530 = sbr.rel (%p528) target = $region44
        $region43: #{tpu_custom_call.1} parent=15 // pred_region
          %s531 = sand.u32 %s37, 1
          %s532 = scalar_lea.sflag [#allocation10], %s531
          %s533 = sand.u32 %s215, 1
          %s534 = scalar_lea.vmem [#allocation11], %s533
          %536 = vsyncadd %s532, 0
          %s537 = scalar_lea.hbm %s6, %s45
          %s539 = sshll.u32 %s537, 4
          %s540 = int_to_ptr.hbm [resolvable:$true] %s539
          %s541 = sshll.u32 %s534, 4
          %s542 = int_to_ptr.vmem [resolvable:$true] %s541
          %544 = dma.hbm_to_vmem [thread:$0]  %s540, 16, %s542, %s532
        $region44: #{tpu_custom_call.1} parent=15 // pred_fallthru
          _
        // Predicated region
        $region45: #{tpu_custom_call.1} parent=15 // pred_check
          %p545 = pneg %p251
        $region46: #{tpu_custom_call.1} parent=15 // pred_check_branch
          %547 = sbr.rel (%p545) target = $region48
        $region47: #{tpu_custom_call.1} parent=15 // pred_region
          %s548 = sand.u32 %s37, 1
          %s549 = scalar_lea.sflag [#allocation13], %s548
          %s550 = sand.u32 %s241, 1
          %s551 = smul.addr %s550, 256
          %s552 = scalar_lea.vmem [#allocation12], %s551
          %554 = vsyncadd %s549, 0
          %s555 = smul.addr %s45, 64
          %s556 = smul.addr %s555, 4
          %s557 = scalar_lea.hbm %s7, %s556
          %s558 = sshll.u32 %s557, 4
          %s559 = int_to_ptr.hbm [resolvable:$true] %s558
          %s560 = sshll.u32 %s552, 4
          %s561 = int_to_ptr.vmem [resolvable:$true] %s560
          %566 = dma.hbm_to_vmem [thread:$0]  %s559, 4096, %s561, %s549, 256, 256, 16
        $region48: #{tpu_custom_call.1} parent=15 // pred_fallthru
          _
        // Predicated region
        $region49: #{tpu_custom_call.1} parent=15 // pred_check
          %p567 = pneg %p277
        $region50: #{tpu_custom_call.1} parent=15 // pred_check_branch
          %569 = sbr.rel (%p567) target = $region52
        $region51: #{tpu_custom_call.1} parent=15 // pred_region
          %s570 = sand.u32 %s37, 1
          %s571 = scalar_lea.sflag [#allocation13], %s570
          %s572 = sand.u32 %s267, 1
          %s573 = smul.addr %s572, 4
          %s574 = scalar_lea.vmem [#allocation14], %s573
          %576 = vsyncadd %s571, 0
          %s577 = smul.addr %s45, 4
          %s578 = scalar_lea.hbm %s8, %s577
          %s580 = sshll.u32 %s578, 4
          %s581 = int_to_ptr.hbm [resolvable:$true] %s580
          %s582 = sshll.u32 %s574, 4
          %s583 = int_to_ptr.vmem [resolvable:$true] %s582
          %585 = dma.hbm_to_vmem [thread:$0]  %s581, 64, %s583, %s571
        $region52: #{tpu_custom_call.1} parent=15 // pred_fallthru
          _
        // Predicated region
        $region53: #{tpu_custom_call.1} parent=15 // pred_check
          %p586 = pneg %p303
        $region54: #{tpu_custom_call.1} parent=15 // pred_check_branch
          %588 = sbr.rel (%p586) target = $region56
        $region55: #{tpu_custom_call.1} parent=15 // pred_region
          %s589 = sand.u32 %s293, 1
          %s590 = scalar_lea.sflag [#allocation16], %s589
          %s591 = sand.u32 %s293, 1
          %s592 = smul.addr %s591, 256
          %s593 = scalar_lea.vmem [#allocation15], %s592
          %595 = vsyncadd %s590, 0
          %s596 = smul.addr %s45, 64
          %s597 = smul.addr %s596, 4
          %s598 = scalar_lea.hbm %s9, %s597
          %s599 = sshll.u32 %s598, 4
          %s600 = int_to_ptr.hbm [resolvable:$true] %s599
          %s601 = sshll.u32 %s593, 4
          %s602 = int_to_ptr.vmem [resolvable:$true] %s601
          %607 = dma.hbm_to_vmem [thread:$0]  %s600, 4096, %s602, %s590, 64, 64, 4
        $region56: #{tpu_custom_call.1} parent=15 // pred_fallthru
          _
        // Predicated region
        $region57: #{tpu_custom_call.1} parent=15 // pred_check
          %p608 = pneg %p329
        $region58: #{tpu_custom_call.1} parent=15 // pred_check_branch
          %610 = sbr.rel (%p608) target = $region60
        $region59: #{tpu_custom_call.1} parent=15 // pred_region
          %p611 = scmp.lt.s32.totalorder %s45, 1
          %s612 = scalar_select %p611, %s45, 1
          %s613 = scalar_lea.vmem %s10, %s612
        $region60: #{tpu_custom_call.1} parent=15 // pred_fallthru
          _
        // Predicated region
        $region61: #{tpu_custom_call.1} parent=15 // pred_check
          %p614 = pneg %p355
        $region62: #{tpu_custom_call.1} parent=15 // pred_check_branch
          %616 = sbr.rel (%p614) target = $region64
        $region63: #{tpu_custom_call.1} parent=15 // pred_region
          %p617 = scmp.lt.s32.totalorder %s45, 1
          %s618 = scalar_select %p617, %s45, 1
          %s619 = scalar_lea.vmem %s11, %s618
        $region64: #{tpu_custom_call.1} parent=15 // pred_fallthru
          _
        // Predicated region
        $region65: #{tpu_custom_call.1} parent=15 // pred_check
          %p620 = pneg %p381
        $region66: #{tpu_custom_call.1} parent=15 // pred_check_branch
          %622 = sbr.rel (%p620) target = $region68
        $region67: #{tpu_custom_call.1} parent=15 // pred_region
          %p623 = scmp.lt.s32.totalorder %s45, 1
          %s624 = scalar_select %p623, %s45, 1
          %s625 = scalar_lea.vmem %s12, %s624
        $region68: #{tpu_custom_call.1} parent=15 // pred_fallthru
          _
      $region16: #{tpu_custom_call.1} parent=5 // pred_fallthru
        _
      %p626 = scmp.le.s32.totalorder 1, %s37
      %p627 = scmp.lt.s32.totalorder %s37, 5
      %p628 = pnand %p626, %p627
      %p629 = pneg %p628
      // Predicated region
      $region69: #{tpu_custom_call.1} parent=5 // pred_check
        _
      $region70: #{tpu_custom_call.1} parent=5 // pred_check_branch
        %631 = sbr.rel (%p628) target = $region72
      $region71: #{tpu_custom_call.1} parent=5 // pred_region
        %s632 = ssub.s32 %s37, 1
        %s633 = sand.u32 %s62, 1
        %s634 = scalar_lea.sflag [#allocation4], %s633
        %s635 = sand.u32 %s62, 1
        %s636 = smul.addr %s635, 8
        %s637 = scalar_lea.vmem [#allocation3], %s636
        // Predicated region
        $region73: #{tpu_custom_call.1} parent=71 // pred_check
          %p638 = pneg %p75
        $region74: #{tpu_custom_call.1} parent=71 // pred_check_branch
          %640 = sbr.rel (%p638) target = $region76
        $region75: #{tpu_custom_call.1} parent=71 // pred_region
          %642 = dma.done %s634, 128
        $region76: #{tpu_custom_call.1} parent=71 // pred_fallthru
          _
        %s643 = sand.u32 %s42, 1
        %s644 = scalar_lea.sflag [#allocation7], %s643
        %s645 = sand.u32 %s88, 1
        %s646 = smul.addr %s645, 192
        %s647 = scalar_lea.vmem [#allocation6], %s646
        // Predicated region
        $region77: #{tpu_custom_call.1} parent=71 // pred_check
          %p648 = pneg %p101
        $region78: #{tpu_custom_call.1} parent=71 // pred_check_branch
          %650 = sbr.rel (%p648) target = $region80
        $region79: #{tpu_custom_call.1} parent=71 // pred_region
          %652 = dma.done %s644, 3072
        $region80: #{tpu_custom_call.1} parent=71 // pred_fallthru
          _
        %s653 = sand.u32 %s42, 1
        %s654 = scalar_lea.sflag [#allocation7], %s653
        %s655 = sand.u32 %s114, 1
        %s656 = smul.addr %s655, 3
        %s657 = scalar_lea.vmem [#allocation8], %s656
        // Predicated region
        $region81: #{tpu_custom_call.1} parent=71 // pred_check
          %p658 = pneg %p127
        $region82: #{tpu_custom_call.1} parent=71 // pred_check_branch
          %660 = sbr.rel (%p658) target = $region84
        $region83: #{tpu_custom_call.1} parent=71 // pred_region
          %662 = dma.done %s654, 48
        $region84: #{tpu_custom_call.1} parent=71 // pred_fallthru
          _
        %s663 = sand.u32 %s42, 1
        %s664 = scalar_lea.sflag [#allocation10], %s663
        %s665 = sand.u32 %s140, 1
        %s666 = smul.addr %s665, 64
        %s667 = scalar_lea.vmem [#allocation9], %s666
        // Predicated region
        $region85: #{tpu_custom_call.1} parent=71 // pred_check
          %p668 = pneg %p153
        $region86: #{tpu_custom_call.1} parent=71 // pred_check_branch
          %670 = sbr.rel (%p668) target = $region88
        $region87: #{tpu_custom_call.1} parent=71 // pred_region
          %672 = dma.done %s664, 1024
        $region88: #{tpu_custom_call.1} parent=71 // pred_fallthru
          _
        %s673 = sand.u32 %s42, 1
        %s674 = scalar_lea.sflag [#allocation10], %s673
        %s675 = sand.u32 %s218, 1
        %s676 = scalar_lea.vmem [#allocation11], %s675
        // Predicated region
        $region89: #{tpu_custom_call.1} parent=71 // pred_check
          %p677 = pneg %p231
        $region90: #{tpu_custom_call.1} parent=71 // pred_check_branch
          %679 = sbr.rel (%p677) target = $region92
        $region91: #{tpu_custom_call.1} parent=71 // pred_region
          %681 = dma.done %s674, 16
        $region92: #{tpu_custom_call.1} parent=71 // pred_fallthru
          _
        %s682 = sand.u32 %s42, 1
        %s683 = scalar_lea.sflag [#allocation13], %s682
        %s684 = sand.u32 %s244, 1
        %s685 = smul.addr %s684, 256
        %s686 = scalar_lea.vmem [#allocation12], %s685
        // Predicated region
        $region93: #{tpu_custom_call.1} parent=71 // pred_check
          %p687 = pneg %p257
        $region94: #{tpu_custom_call.1} parent=71 // pred_check_branch
          %689 = sbr.rel (%p687) target = $region96
        $region95: #{tpu_custom_call.1} parent=71 // pred_region
          %691 = dma.done %s683, 4096
        $region96: #{tpu_custom_call.1} parent=71 // pred_fallthru
          _
        %s692 = sand.u32 %s42, 1
        %s693 = scalar_lea.sflag [#allocation13], %s692
        %s694 = sand.u32 %s270, 1
        %s695 = smul.addr %s694, 4
        %s696 = scalar_lea.vmem [#allocation14], %s695
        // Predicated region
        $region97: #{tpu_custom_call.1} parent=71 // pred_check
          %p697 = pneg %p283
        $region98: #{tpu_custom_call.1} parent=71 // pred_check_branch
          %699 = sbr.rel (%p697) target = $region100
        $region99: #{tpu_custom_call.1} parent=71 // pred_region
          %701 = dma.done %s693, 64
        $region100: #{tpu_custom_call.1} parent=71 // pred_fallthru
          _
        %s702 = sand.u32 %s296, 1
        %s703 = scalar_lea.sflag [#allocation16], %s702
        %s704 = sand.u32 %s296, 1
        %s705 = smul.addr %s704, 256
        %s706 = scalar_lea.vmem [#allocation15], %s705
        // Predicated region
        $region101: #{tpu_custom_call.1} parent=71 // pred_check
          %p707 = pneg %p309
        $region102: #{tpu_custom_call.1} parent=71 // pred_check_branch
          %709 = sbr.rel (%p707) target = $region104
        $region103: #{tpu_custom_call.1} parent=71 // pred_region
          %711 = dma.done %s703, 4096
        $region104: #{tpu_custom_call.1} parent=71 // pred_fallthru
          _
        %s712 = sand.u32 %s62, 1
        %s713 = scalar_lea.sflag [#allocation4], %s712
        %s714 = sand.u32 %s62, 1
        %s715 = smul.addr %s714, 8
        %s716 = scalar_lea.vmem [#allocation3], %s715
        %p717 = pneg %p75
        %p718 = pneg %p72
        %s719 = sand.u32 %s42, 1
        %s720 = scalar_lea.sflag [#allocation7], %s719
        %s721 = sand.u32 %s88, 1
        %s722 = smul.addr %s721, 192
        %s723 = scalar_lea.vmem [#allocation6], %s722
        %p724 = pneg %p101
        %p725 = pneg %p98
        %s726 = sand.u32 %s42, 1
        %s727 = scalar_lea.sflag [#allocation7], %s726
        %s728 = sand.u32 %s114, 1
        %s729 = smul.addr %s728, 3
        %s730 = scalar_lea.vmem [#allocation8], %s729
        %p731 = pneg %p127
        %p732 = pneg %p124
        %s733 = sand.u32 %s42, 1
        %s734 = scalar_lea.sflag [#allocation10], %s733
        %s735 = sand.u32 %s140, 1
        %s736 = smul.addr %s735, 64
        %s737 = scalar_lea.vmem [#allocation9], %s736
        %p738 = pneg %p153
        %p739 = pneg %p150
        %p740 = scmp.lt.s32.totalorder %s47, 1
        %s741 = scalar_select %p740, %s47, 1
        %s742 = scalar_lea.vmem %s4, %s741
        %p743 = pneg %p179
        %p744 = pneg %p176
        %p745 = scmp.lt.s32.totalorder %s47, 1
        %s746 = scalar_select %p745, %s47, 1
        %s747 = scalar_lea.vmem %s5, %s746
        %p748 = pneg %p205
        %p749 = pneg %p202
        %s750 = sand.u32 %s42, 1
        %s751 = scalar_lea.sflag [#allocation10], %s750
        %s752 = sand.u32 %s218, 1
        %s753 = scalar_lea.vmem [#allocation11], %s752
        %p754 = pneg %p231
        %p755 = pneg %p228
        %s756 = sand.u32 %s42, 1
        %s757 = scalar_lea.sflag [#allocation13], %s756
        %s758 = sand.u32 %s244, 1
        %s759 = smul.addr %s758, 256
        %s760 = scalar_lea.vmem [#allocation12], %s759
        %p761 = pneg %p257
        %p762 = pneg %p254
        %s763 = sand.u32 %s42, 1
        %s764 = scalar_lea.sflag [#allocation13], %s763
        %s765 = sand.u32 %s270, 1
        %s766 = smul.addr %s765, 4
        %s767 = scalar_lea.vmem [#allocation14], %s766
        %p768 = pneg %p283
        %p769 = pneg %p280
        %s770 = sand.u32 %s296, 1
        %s771 = scalar_lea.sflag [#allocation16], %s770
        %s772 = sand.u32 %s296, 1
        %s773 = smul.addr %s772, 256
        %s774 = scalar_lea.vmem [#allocation15], %s773
        %p775 = pneg %p309
        %p776 = pneg %p306
        %p777 = scmp.lt.s32.totalorder %s47, 1
        %s778 = scalar_select %p777, %s47, 1
        %s779 = scalar_lea.vmem %s10, %s778
        %p780 = pneg %p335
        %p781 = pneg %p332
        %p782 = scmp.lt.s32.totalorder %s47, 1
        %s783 = scalar_select %p782, %s47, 1
        %s784 = scalar_lea.vmem %s11, %s783
        %p785 = pneg %p361
        %p786 = pneg %p358
        %p787 = scmp.lt.s32.totalorder %s47, 1
        %s788 = scalar_select %p787, %s47, 1
        %s789 = scalar_lea.vmem %s12, %s788
        %p790 = pneg %p387
        %p791 = pneg %p384
        %p792 = pneg %p415
        %p793 = pneg %p412
        %s794 = sand.u32 %s402, 1
        %s795 = scalar_lea.sflag [#allocation5], %s794
        %s796 = sand.u32 %s402, 1
        %s797 = smul.addr %s796, 8
        %s798 = scalar_lea.vmem [#allocation17], %s797
        %p799 = scmp.lt.s32.totalorder %s47, 1
        %s800 = scalar_select %p799, %s47, 1
        %s801 = scalar_lea.vmem %s4, %s800
        %p802 = scmp.lt.s32.totalorder %s47, 1
        %s803 = scalar_select %p802, %s47, 1
        %s804 = scalar_lea.vmem %s5, %s803
        %p805 = scmp.lt.s32.totalorder %s47, 1
        %s806 = scalar_select %p805, %s47, 1
        %s807 = scalar_lea.vmem %s10, %s806
        %p808 = scmp.lt.s32.totalorder %s47, 1
        %s809 = scalar_select %p808, %s47, 1
        %s810 = scalar_lea.vmem %s11, %s809
        %p811 = scmp.lt.s32.totalorder %s47, 1
        %s812 = scalar_select %p811, %s47, 1
        %s813 = scalar_lea.vmem %s12, %s812
        %p815 = scmp.eq.s32.totalorder %s47, 0
        // Predicated region
        $region105: #{tpu_custom_call.1} parent=71 // pred_check
          %p816 = pneg %p815
        $region106: #{tpu_custom_call.1} parent=71 // pred_check_branch
          %818 = sbr.rel (%p816) target = $region108
        $region107: #{tpu_custom_call.1} parent=71 // pred_region
          %v819 = vld [vmem:[%s637] sm:$0xff]
          %820 = vst [vmem:[#allocation2] sm:$0xff] %v819
        $region108: #{tpu_custom_call.1} parent=71 // pred_fallthru
          _
        %v821 = vld [vmem:[#allocation2] sm:$0xff]
        %v822 = vpack.c.bf16 %v821, %v821
        %v823 = vld [vmem:[%s647] sm:$0xff]
        %v824 = vld [vmem:[%s647 + $0x8] sm:$0xf]
        %v825 = vld [vmem:[%s647 + $0xc] sm:$0xff]
        %v826 = vld [vmem:[%s647 + $0x14] sm:$0xf]
        %v827 = vld [vmem:[%s647 + $0x18] sm:$0xff]
        %v828 = vld [vmem:[%s647 + $0x20] sm:$0xf]
        %v829 = vld [vmem:[%s647 + $0x24] sm:$0xff]
        %v830 = vld [vmem:[%s647 + $0x2c] sm:$0xf]
        %v831 = vld [vmem:[%s647 + $0x30] sm:$0xff]
        %v832 = vld [vmem:[%s647 + $0x38] sm:$0xf]
        %v833 = vld [vmem:[%s647 + $0x3c] sm:$0xff]
        %v834 = vld [vmem:[%s647 + $0x44] sm:$0xf]
        %v835 = vld [vmem:[%s647 + $0x48] sm:$0xff]
        %v836 = vld [vmem:[%s647 + $0x50] sm:$0xf]
        %v837 = vld [vmem:[%s647 + $0x54] sm:$0xff]
        %v838 = vld [vmem:[%s647 + $0x5c] sm:$0xf]
        %v839 = vld [vmem:[%s647 + $0x60] sm:$0xff]
        %v840 = vld [vmem:[%s647 + $0x68] sm:$0xf]
        %v841 = vld [vmem:[%s647 + $0x6c] sm:$0xff]
        %v842 = vld [vmem:[%s647 + $0x74] sm:$0xf]
        %v843 = vld [vmem:[%s647 + $0x78] sm:$0xff]
        %v844 = vld [vmem:[%s647 + $0x80] sm:$0xf]
        %v845 = vld [vmem:[%s647 + $0x84] sm:$0xff]
        %v846 = vld [vmem:[%s647 + $0x8c] sm:$0xf]
        %v847 = vld [vmem:[%s647 + $0x90] sm:$0xff]
        %v848 = vld [vmem:[%s647 + $0x98] sm:$0xf]
        %v849 = vld [vmem:[%s647 + $0x9c] sm:$0xff]
        %v850 = vld [vmem:[%s647 + $0xa4] sm:$0xf]
        %v851 = vld [vmem:[%s647 + $0xa8] sm:$0xff]
        %v852 = vld [vmem:[%s647 + $0xb0] sm:$0xf]
        %v853 = vld [vmem:[%s647 + $0xb4] sm:$0xff]
        %v854 = vld [vmem:[%s647 + $0xbc] sm:$0xf]
        %v855 = vld [vmem:[%s657] sm:$0x7]
        %v857 = vperm.slane %v855, 0
        %v858 = vperm.slane %v855, 1
        %v859 = vperm.slane %v855, 2
        %v895 = vunpack.c.l.b16 %v823
        %v896 = vunpack.c.h.b16 %v823
        %v897 = vunpack.c.l.b16 %v824
        %v898 = vunpack.c.l.b16 %v825
        %v899 = vunpack.c.h.b16 %v825
        %v900 = vunpack.c.l.b16 %v826
        %v901 = vunpack.c.l.b16 %v827
        %v902 = vunpack.c.h.b16 %v827
        %v903 = vunpack.c.l.b16 %v828
        %v904 = vunpack.c.l.b16 %v829
        %v905 = vunpack.c.h.b16 %v829
        %v906 = vunpack.c.l.b16 %v830
        %v907 = vunpack.c.l.b16 %v831
        %v908 = vunpack.c.h.b16 %v831
        %v909 = vunpack.c.l.b16 %v832
        %v910 = vunpack.c.l.b16 %v833
        %v911 = vunpack.c.h.b16 %v833
        %v912 = vunpack.c.l.b16 %v834
        %v913 = vunpack.c.l.b16 %v835
        %v914 = vunpack.c.h.b16 %v835
        %v915 = vunpack.c.l.b16 %v836
        %v916 = vunpack.c.l.b16 %v837
        %v917 = vunpack.c.h.b16 %v837
        %v918 = vunpack.c.l.b16 %v838
        %v919 = vunpack.c.l.b16 %v839
        %v920 = vunpack.c.h.b16 %v839
        %v921 = vunpack.c.l.b16 %v840
        %v922 = vunpack.c.l.b16 %v841
        %v923 = vunpack.c.h.b16 %v841
        %v924 = vunpack.c.l.b16 %v842
        %v925 = vunpack.c.l.b16 %v843
        %v926 = vunpack.c.h.b16 %v843
        %v927 = vunpack.c.l.b16 %v844
        %v928 = vunpack.c.l.b16 %v845
        %v929 = vunpack.c.h.b16 %v845
        %v930 = vunpack.c.l.b16 %v846
        %v931 = vunpack.c.l.b16 %v847
        %v932 = vunpack.c.h.b16 %v847
        %v933 = vunpack.c.l.b16 %v848
        %v934 = vunpack.c.l.b16 %v849
        %v935 = vunpack.c.h.b16 %v849
        %v936 = vunpack.c.l.b16 %v850
        %v937 = vunpack.c.l.b16 %v851
        %v938 = vunpack.c.h.b16 %v851
        %v939 = vunpack.c.l.b16 %v852
        %v940 = vunpack.c.l.b16 %v853
        %v941 = vunpack.c.h.b16 %v853
        %v942 = vunpack.c.l.b16 %v854
        %v943 = vpack.c.b16 %v898, %v895
        %v944 = vpack.c.b16 %v899, %v896
        %v945 = vpack.c.b16 %v900, %v897
        %v946 = vpack.c.b16 %v904, %v901
        %v947 = vpack.c.b16 %v905, %v902
        %v948 = vpack.c.b16 %v906, %v903
        %v949 = vpack.c.b16 %v910, %v907
        %v950 = vpack.c.b16 %v911, %v908
        %v951 = vpack.c.b16 %v912, %v909
        %v952 = vpack.c.b16 %v916, %v913
        %v953 = vpack.c.b16 %v917, %v914
        %v954 = vpack.c.b16 %v918, %v915
        %v955 = vpack.c.b16 %v922, %v919
        %v956 = vpack.c.b16 %v923, %v920
        %v957 = vpack.c.b16 %v924, %v921
        %v958 = vpack.c.b16 %v928, %v925
        %v959 = vpack.c.b16 %v929, %v926
        %v960 = vpack.c.b16 %v930, %v927
        %v961 = vpack.c.b16 %v934, %v931
        %v962 = vpack.c.b16 %v935, %v932
        %v963 = vpack.c.b16 %v936, %v933
        %v964 = vpack.c.b16 %v940, %v937
        %v965 = vpack.c.b16 %v941, %v938
        %v966 = vpack.c.b16 %v942, %v939
        %991 = vmatpush.bf16.msra.mxu0 %v964
        %992 = vmatpush.bf16.msra.mxu0 %v961
        %993 = vmatpush.bf16.msra.mxu0 %v958
        %994 = vmatpush.bf16.msra.mxu0 %v955
        %995 = vmatpush.bf16.msra.mxu0 %v952
        %996 = vmatpush.bf16.msra.mxu0 %v949
        %997 = vmatpush.bf16.msra.mxu0 %v946
        %998 = vmatpush.bf16.msra.mxu0 %v943
        %999 = vmatmul.bf16.gmra.mxu0 %v822
        %v1000 = vpop.f32.mrf.mxu0
        %v1001 = vadd.f32 %v857, %v1000
        %v1002 = vpop.f32.mrf.mxu0
        %1003 = vdwg.mxu0
        %1004 = vmatpush.bf16.msra.mxu0 %v965
        %1005 = vmatpush.bf16.msra.mxu0 %v962
        %1006 = vmatpush.bf16.msra.mxu0 %v959
        %1007 = vmatpush.bf16.msra.mxu0 %v956
        %1008 = vmatpush.bf16.msra.mxu0 %v953
        %1009 = vmatpush.bf16.msra.mxu0 %v950
        %1010 = vmatpush.bf16.msra.mxu0 %v947
        %1011 = vmatpush.bf16.msra.mxu0 %v944
        %1012 = vmatmul.bf16.gmra.mxu0 %v822
        %v1013 = vpop.f32.mrf.mxu0
        %v1014 = vadd.f32 %v858, %v1013
        %v1015 = vpop.f32.mrf.mxu0
        %1016 = vdwg.mxu0
        %1017 = vmatpush.bf16.msra.mxu0 %v966
        %1018 = vmatpush.bf16.msra.mxu0 %v963
        %1019 = vmatpush.bf16.msra.mxu0 %v960
        %1020 = vmatpush.bf16.msra.mxu0 %v957
        %1021 = vmatpush.bf16.msra.mxu0 %v954
        %1022 = vmatpush.bf16.msra.mxu0 %v951
        %1023 = vmatpush.bf16.msra.mxu0 %v948
        %1024 = vmatpush.bf16.msra.mxu0 %v945
        %1025 = vmatmul.bf16.gmra.mxu0 %v822
        %v1026 = vpop.f32.mrf.mxu0
        %v1027 = vadd.f32 %v859, %v1026
        %v1028 = vpop.f32.mrf.mxu0
        %1029 = vdwg.mxu0
        %v1030 = vpack.c.bf16 %v1001, %v1001
        %v1031 = vpack.c.bf16 %v1014, %v1014
        %v1032 = vpack.c.bf16 %v1027, %v1027
        %1034 = vrot.lane.b32.xlu0 %v1030, 96
        %v1035 = vpop.permute.xlu0 %1034
        %1036 = vrot.lane.b32.xlu0 %v1030, 64
        %v1037 = vpop.permute.xlu0 %1036
        %1038 = vrot.lane.b32.xlu0 %v1030, 32
        %v1039 = vpop.permute.xlu0 %1038
        %1041 = vrot.lane.b32.xlu0 %v1031, 96
        %v1042 = vpop.permute.xlu0 %1041
        %1043 = vrot.lane.b32.xlu0 %v1031, 64
        %v1044 = vpop.permute.xlu0 %1043
        %1045 = vrot.lane.b32.xlu0 %v1031, 32
        %v1046 = vpop.permute.xlu0 %1045
        %1048 = vrot.lane.b32.xlu0 %v1032, 96
        %v1049 = vpop.permute.xlu0 %1048
        %1050 = vrot.lane.b32.xlu0 %v1032, 64
        %v1051 = vpop.permute.xlu0 %1050
        %1052 = vrot.lane.b32.xlu0 %v1032, 32
        %v1053 = vpop.permute.xlu0 %1052
        %vm1054 = vcmask 261120
        %v1056 = vsel %vm1054, %v1030, 0
        %v1059 = vsel %vm1054, %v1031, 0
        %1061 = vmatpush.bf16.xpose.msra.mxu0 0
        %1062 = vmatpush.bf16.xpose.msra.mxu0 0
        %1063 = vmatpush.bf16.xpose.msra.mxu0 0
        %1064 = vmatpush.bf16.xpose.msra.mxu0 0
        %1065 = vmatpush.bf16.xpose.msra.mxu0 0
        %1066 = vmatpush.bf16.xpose.msra.mxu0 0
        %1067 = vmatpush.bf16.xpose.msra.mxu0 0
        %1068 = vmatpush.bf16.xpose.msra.mxu0 %v1059
        %1069 = vmatmul.bf16.gmra.mxu0 %v1056
        %v1070 = vpop.f32.mrf.mxu0
        %v1071 = vadd.f32 0.0, %v1070
        %v1072 = vpop.f32.mrf.mxu0
        %1073 = vdwg.mxu0
        %v1075 = vsel %vm1054, %v1035, 0
        %v1078 = vsel %vm1054, %v1042, 0
        %1080 = vmatpush.bf16.xpose.msra.mxu0 0
        %1081 = vmatpush.bf16.xpose.msra.mxu0 0
        %1082 = vmatpush.bf16.xpose.msra.mxu0 0
        %1083 = vmatpush.bf16.xpose.msra.mxu0 0
        %1084 = vmatpush.bf16.xpose.msra.mxu0 0
        %1085 = vmatpush.bf16.xpose.msra.mxu0 0
        %1086 = vmatpush.bf16.xpose.msra.mxu0 0
        %1087 = vmatpush.bf16.xpose.msra.mxu0 %v1078
        %1088 = vmatmul.bf16.gmra.mxu0 %v1075
        %v1089 = vpop.f32.mrf.mxu0
        %v1090 = vadd.f32 0.0, %v1089
        %v1091 = vpop.f32.mrf.mxu0
        %1092 = vdwg.mxu0
        %v1094 = vsel %vm1054, %v1037, 0
        %v1097 = vsel %vm1054, %v1044, 0
        %1099 = vmatpush.bf16.xpose.msra.mxu0 0
        %1100 = vmatpush.bf16.xpose.msra.mxu0 0
        %1101 = vmatpush.bf16.xpose.msra.mxu0 0
        %1102 = vmatpush.bf16.xpose.msra.mxu0 0
        %1103 = vmatpush.bf16.xpose.msra.mxu0 0
        %1104 = vmatpush.bf16.xpose.msra.mxu0 0
        %1105 = vmatpush.bf16.xpose.msra.mxu0 0
        %1106 = vmatpush.bf16.xpose.msra.mxu0 %v1097
        %1107 = vmatmul.bf16.gmra.mxu0 %v1094
        %v1108 = vpop.f32.mrf.mxu0
        %v1109 = vadd.f32 0.0, %v1108
        %v1110 = vpop.f32.mrf.mxu0
        %1111 = vdwg.mxu0
        %v1113 = vsel %vm1054, %v1039, 0
        %v1116 = vsel %vm1054, %v1046, 0
        %1118 = vmatpush.bf16.xpose.msra.mxu0 0
        %1119 = vmatpush.bf16.xpose.msra.mxu0 0
        %1120 = vmatpush.bf16.xpose.msra.mxu0 0
        %1121 = vmatpush.bf16.xpose.msra.mxu0 0
        %1122 = vmatpush.bf16.xpose.msra.mxu0 0
        %1123 = vmatpush.bf16.xpose.msra.mxu0 0
        %1124 = vmatpush.bf16.xpose.msra.mxu0 0
        %1125 = vmatpush.bf16.xpose.msra.mxu0 %v1116
        %1126 = vmatmul.bf16.gmra.mxu0 %v1113
        %v1127 = vpop.f32.mrf.mxu0
        %v1128 = vadd.f32 0.0, %v1127
        %v1129 = vpop.f32.mrf.mxu0
        %1130 = vdwg.mxu0
        %vm1131 = vcmask 64512
        %v1132 = vsel %vm1131, %v1071, -inf
        %1133 = vmax.xlane.f32.xlu0 %v1132
        %v1134 = vpop.xlane.xlu0 %1133
        %v1135 = vsel %vm1131, %v1090, -inf
        %1136 = vmax.xlane.f32.xlu0 %v1135
        %v1137 = vpop.xlane.xlu0 %1136
        %v1138 = vsel %vm1131, %v1109, -inf
        %1139 = vmax.xlane.f32.xlu0 %v1138
        %v1140 = vpop.xlane.xlu0 %1139
        %v1141 = vsel %vm1131, %v1128, -inf
        %1142 = vmax.xlane.f32.xlu0 %v1141
        %v1143 = vpop.xlane.xlu0 %1142
        %v1144 = vsub.f32 %v1071, %v1134
        %v1145 = vsub.f32 %v1090, %v1137
        %v1146 = vsub.f32 %v1109, %v1140
        %v1147 = vsub.f32 %v1128, %v1143
        %v1148 = vmul.f32 %v1144, 1.442695
        %v1149 = vpow.pop %v1148
        %v1150 = vmul.f32 %v1145, 1.442695
        %v1151 = vpow.pop %v1150
        %v1152 = vmul.f32 %v1146, 1.442695
        %v1153 = vpow.pop %v1152
        %v1154 = vmul.f32 %v1147, 1.442695
        %v1155 = vpow.pop %v1154
        %v1156 = vsel %vm1131, %v1149, 0.0
        %1157 = vadd.xlane.f32.xlu0 %v1156
        %v1158 = vpop.xlane.xlu0 %1157
        %v1159 = vsel %vm1131, %v1151, 0.0
        %1160 = vadd.xlane.f32.xlu0 %v1159
        %v1161 = vpop.xlane.xlu0 %1160
        %v1162 = vsel %vm1131, %v1153, 0.0
        %1163 = vadd.xlane.f32.xlu0 %v1162
        %v1164 = vpop.xlane.xlu0 %1163
        %v1165 = vsel %vm1131, %v1155, 0.0
        %1166 = vadd.xlane.f32.xlu0 %v1165
        %v1167 = vpop.xlane.xlu0 %1166
        %v1168 = vrcp.pop %v1158
        %v1169 = vrcp.pop %v1161
        %v1170 = vrcp.pop %v1164
        %v1171 = vrcp.pop %v1167
        %v1172 = vmul.f32 %v1149, %v1168
        %v1173 = vmul.f32 %v1151, %v1169
        %v1174 = vmul.f32 %v1153, %v1170
        %v1175 = vmul.f32 %v1155, %v1171
        %v1176 = vpack.c.bf16 %v1172, %v1172
        %v1177 = vpack.c.bf16 %v1173, %v1173
        %v1178 = vpack.c.bf16 %v1174, %v1174
        %v1179 = vpack.c.bf16 %v1175, %v1175
        %v1181 = vsel %vm1131, %v1176, 0
        %vm1183 = vcmask 1043456
        %v1185 = vsel %vm1183, %v1032, 0
        %1187 = vmatpush.bf16.msra.mxu0 0
        %1188 = vmatpush.bf16.msra.mxu0 0
        %1189 = vmatpush.bf16.msra.mxu0 0
        %1190 = vmatpush.bf16.msra.mxu0 0
        %1191 = vmatpush.bf16.msra.mxu0 0
        %1192 = vmatpush.bf16.msra.mxu0 0
        %1193 = vmatpush.bf16.msra.mxu0 0
        %1194 = vmatpush.bf16.msra.mxu0 %v1185
        %1195 = vmatmul.bf16.gmra.mxu0 %v1181
        %v1196 = vpop.f32.mrf.mxu0
        %v1197 = vadd.f32 0.0, %v1196
        %v1198 = vpop.f32.mrf.mxu0
        %1199 = vdwg.mxu0
        %v1201 = vsel %vm1131, %v1177, 0
        %v1204 = vsel %vm1183, %v1049, 0
        %1206 = vmatpush.bf16.msra.mxu0 0
        %1207 = vmatpush.bf16.msra.mxu0 0
        %1208 = vmatpush.bf16.msra.mxu0 0
        %1209 = vmatpush.bf16.msra.mxu0 0
        %1210 = vmatpush.bf16.msra.mxu0 0
        %1211 = vmatpush.bf16.msra.mxu0 0
        %1212 = vmatpush.bf16.msra.mxu0 0
        %1213 = vmatpush.bf16.msra.mxu0 %v1204
        %1214 = vmatmul.bf16.gmra.mxu0 %v1201
        %v1215 = vpop.f32.mrf.mxu0
        %v1216 = vadd.f32 0.0, %v1215
        %v1217 = vpop.f32.mrf.mxu0
        %1218 = vdwg.mxu0
        %v1220 = vsel %vm1131, %v1178, 0
        %v1223 = vsel %vm1183, %v1051, 0
        %1225 = vmatpush.bf16.msra.mxu0 0
        %1226 = vmatpush.bf16.msra.mxu0 0
        %1227 = vmatpush.bf16.msra.mxu0 0
        %1228 = vmatpush.bf16.msra.mxu0 0
        %1229 = vmatpush.bf16.msra.mxu0 0
        %1230 = vmatpush.bf16.msra.mxu0 0
        %1231 = vmatpush.bf16.msra.mxu0 0
        %1232 = vmatpush.bf16.msra.mxu0 %v1223
        %1233 = vmatmul.bf16.gmra.mxu0 %v1220
        %v1234 = vpop.f32.mrf.mxu0
        %v1235 = vadd.f32 0.0, %v1234
        %v1236 = vpop.f32.mrf.mxu0
        %1237 = vdwg.mxu0
        %v1239 = vsel %vm1131, %v1179, 0
        %v1242 = vsel %vm1183, %v1053, 0
        %1244 = vmatpush.bf16.msra.mxu0 0
        %1245 = vmatpush.bf16.msra.mxu0 0
        %1246 = vmatpush.bf16.msra.mxu0 0
        %1247 = vmatpush.bf16.msra.mxu0 0
        %1248 = vmatpush.bf16.msra.mxu0 0
        %1249 = vmatpush.bf16.msra.mxu0 0
        %1250 = vmatpush.bf16.msra.mxu0 0
        %1251 = vmatpush.bf16.msra.mxu0 %v1242
        %1252 = vmatmul.bf16.gmra.mxu0 %v1239
        %v1253 = vpop.f32.mrf.mxu0
        %v1254 = vadd.f32 0.0, %v1253
        %v1255 = vpop.f32.mrf.mxu0
        %1256 = vdwg.mxu0
        %v1257 = vpack.c.bf16 %v1197, %v1197
        %v1258 = vpack.c.bf16 %v1216, %v1216
        %v1259 = vpack.c.bf16 %v1235, %v1235
        %v1260 = vpack.c.bf16 %v1254, %v1254
        %v1262 = vunpack.c.l.b16 %v1258
        %v1263 = vpack.c.b16 %v1262, %v1262
        %1264 = vrot.lane.b32.xlu0 %v1263, 32
        %v1265 = vpop.permute.xlu0 %1264
        %v1267 = vunpack.c.l.b16 %v1259
        %v1268 = vpack.c.b16 %v1267, %v1267
        %1269 = vrot.lane.b32.xlu0 %v1268, 64
        %v1270 = vpop.permute.xlu0 %1269
        %v1272 = vunpack.c.l.b16 %v1260
        %v1273 = vpack.c.b16 %v1272, %v1272
        %1274 = vrot.lane.b32.xlu0 %v1273, 96
        %v1275 = vpop.permute.xlu0 %1274
        %v1278 = vsel %vm1054, %v1257, %v1265
        %vm1279 = vcmask 523264
        %v1281 = vsel %vm1279, %v1278, %v1270
        %vm1282 = vcmask 785408
        %v1284 = vsel %vm1282, %v1281, %v1275
        %v1286 = vld [vmem:[%s667] sm:$0xf]
        %v1287 = vld [vmem:[%s667 + $0x4] sm:$0xf]
        %v1288 = vld [vmem:[%s667 + $0x8] sm:$0xf]
        %v1289 = vld [vmem:[%s667 + $0xc] sm:$0xf]
        %v1290 = vld [vmem:[%s667 + $0x10] sm:$0xf]
        %v1291 = vld [vmem:[%s667 + $0x14] sm:$0xf]
        %v1292 = vld [vmem:[%s667 + $0x18] sm:$0xf]
        %v1293 = vld [vmem:[%s667 + $0x1c] sm:$0xf]
        %v1294 = vld [vmem:[%s667 + $0x20] sm:$0xf]
        %v1295 = vld [vmem:[%s667 + $0x24] sm:$0xf]
        %v1296 = vld [vmem:[%s667 + $0x28] sm:$0xf]
        %v1297 = vld [vmem:[%s667 + $0x2c] sm:$0xf]
        %v1298 = vld [vmem:[%s667 + $0x30] sm:$0xf]
        %v1299 = vld [vmem:[%s667 + $0x34] sm:$0xf]
        %v1300 = vld [vmem:[%s667 + $0x38] sm:$0xf]
        %v1301 = vld [vmem:[%s667 + $0x3c] sm:$0xf]
        %v1302 = vld [vmem:[%s801] sm:$0x1]
        %v1304 = vperm.slane %v1302, 0
        %v1322 = vunpack.c.l.b16 %v1286
        %v1323 = vunpack.c.l.b16 %v1287
        %v1324 = vunpack.c.l.b16 %v1288
        %v1325 = vunpack.c.l.b16 %v1289
        %v1326 = vunpack.c.l.b16 %v1290
        %v1327 = vunpack.c.l.b16 %v1291
        %v1328 = vunpack.c.l.b16 %v1292
        %v1329 = vunpack.c.l.b16 %v1293
        %v1330 = vunpack.c.l.b16 %v1294
        %v1331 = vunpack.c.l.b16 %v1295
        %v1332 = vunpack.c.l.b16 %v1296
        %v1333 = vunpack.c.l.b16 %v1297
        %v1334 = vunpack.c.l.b16 %v1298
        %v1335 = vunpack.c.l.b16 %v1299
        %v1336 = vunpack.c.l.b16 %v1300
        %v1337 = vunpack.c.l.b16 %v1301
        %v1338 = vpack.c.b16 %v1323, %v1322
        %v1339 = vpack.c.b16 %v1325, %v1324
        %v1340 = vpack.c.b16 %v1327, %v1326
        %v1341 = vpack.c.b16 %v1329, %v1328
        %v1342 = vpack.c.b16 %v1331, %v1330
        %v1343 = vpack.c.b16 %v1333, %v1332
        %v1344 = vpack.c.b16 %v1335, %v1334
        %v1345 = vpack.c.b16 %v1337, %v1336
        %1354 = vmatpush.bf16.msra.mxu0 %v1345
        %1355 = vmatpush.bf16.msra.mxu0 %v1344
        %1356 = vmatpush.bf16.msra.mxu0 %v1343
        %1357 = vmatpush.bf16.msra.mxu0 %v1342
        %1358 = vmatpush.bf16.msra.mxu0 %v1341
        %1359 = vmatpush.bf16.msra.mxu0 %v1340
        %1360 = vmatpush.bf16.msra.mxu0 %v1339
        %1361 = vmatpush.bf16.msra.mxu0 %v1338
        %1362 = vmatmul.bf16.gmra.mxu0 %v1284
        %v1363 = vpop.f32.mrf.mxu0
        %v1364 = vadd.f32 %v1304, %v1363
        %v1365 = vpop.f32.mrf.mxu0
        %1366 = vdwg.mxu0
        %v1367 = vadd.f32 %v1364, %v821
        %1368 = vadd.xlane.f32.xlu0 %v1367
        %v1369 = vpop.xlane.xlu0 %1368
        %v1370 = vrcp.pop 128.0
        %v1371 = vmul.f32 128.0, %v1370
        %v1372 = vsub.f32 1.0, %v1371
        %v1373 = vmul.f32 %v1370, %v1372
        %v1374 = vadd.f32 %v1370, %v1373
        %vm1375 = vweird.f32 %v1370
        %v1376 = vsel %vm1375, %v1370, %v1374
        %v1377 = vmul.f32 %v1369, %v1376
        %v1378 = vsub.f32 %v1367, %v1377
        %v1379 = vmul.f32 %v1378, %v1378
        %1380 = vadd.xlane.f32.xlu0 %v1379
        %v1381 = vpop.xlane.xlu0 %1380
        %v1382 = vmul.f32 %v1381, %v1376
        %v1383 = vadd.f32 %v1382, 1e-05
        %v1384 = vrsqrt.pop %v1383
        %v1385 = vmul.f32 %v1384, %v1383
        %v1386 = vmul.f32 %v1385, %v1384
        %v1387 = vmul.f32 0.5, %v1386
        %v1388 = vsub.f32 1.5, %v1387
        %v1389 = vmul.f32 %v1384, %v1388
        %vm1390 = vweird.f32 %v1383
        %vm1391 = vweird.f32 %v1384
        %vm1392 = vmor %vm1390, %vm1391
        %v1393 = vsel %vm1392, %v1384, %v1389
        %v1394 = vmul.f32 %v1378, %v1393
        %v1395 = vld [vmem:[%s804] sm:$0x1]
        %v1397 = vperm.slane %v1395, 0
        %v1399 = vmul.f32 %v1394, %v1397
        %v1400 = vld [vmem:[%s676] sm:$0x1]
        %v1402 = vperm.slane %v1400, 0
        %v1404 = vadd.f32 %v1399, %v1402
        %v1405 = vpack.c.bf16 %v1404, %v1404
        %v1406 = vld [vmem:[%s686] sm:$0xff]
        %v1407 = vld [vmem:[%s686 + $0x8] sm:$0xff]
        %v1408 = vld [vmem:[%s686 + $0x10] sm:$0xff]
        %v1409 = vld [vmem:[%s686 + $0x18] sm:$0xff]
        %v1410 = vld [vmem:[%s686 + $0x20] sm:$0xff]
        %v1411 = vld [vmem:[%s686 + $0x28] sm:$0xff]
        %v1412 = vld [vmem:[%s686 + $0x30] sm:$0xff]
        %v1413 = vld [vmem:[%s686 + $0x38] sm:$0xff]
        %v1414 = vld [vmem:[%s686 + $0x40] sm:$0xff]
        %v1415 = vld [vmem:[%s686 + $0x48] sm:$0xff]
        %v1416 = vld [vmem:[%s686 + $0x50] sm:$0xff]
        %v1417 = vld [vmem:[%s686 + $0x58] sm:$0xff]
        %v1418 = vld [vmem:[%s686 + $0x60] sm:$0xff]
        %v1419 = vld [vmem:[%s686 + $0x68] sm:$0xff]
        %v1420 = vld [vmem:[%s686 + $0x70] sm:$0xff]
        %v1421 = vld [vmem:[%s686 + $0x78] sm:$0xff]
        %v1422 = vld [vmem:[%s686 + $0x80] sm:$0xff]
        %v1423 = vld [vmem:[%s686 + $0x88] sm:$0xff]
        %v1424 = vld [vmem:[%s686 + $0x90] sm:$0xff]
        %v1425 = vld [vmem:[%s686 + $0x98] sm:$0xff]
        %v1426 = vld [vmem:[%s686 + $0xa0] sm:$0xff]
        %v1427 = vld [vmem:[%s686 + $0xa8] sm:$0xff]
        %v1428 = vld [vmem:[%s686 + $0xb0] sm:$0xff]
        %v1429 = vld [vmem:[%s686 + $0xb8] sm:$0xff]
        %v1430 = vld [vmem:[%s686 + $0xc0] sm:$0xff]
        %v1431 = vld [vmem:[%s686 + $0xc8] sm:$0xff]
        %v1432 = vld [vmem:[%s686 + $0xd0] sm:$0xff]
        %v1433 = vld [vmem:[%s686 + $0xd8] sm:$0xff]
        %v1434 = vld [vmem:[%s686 + $0xe0] sm:$0xff]
        %v1435 = vld [vmem:[%s686 + $0xe8] sm:$0xff]
        %v1436 = vld [vmem:[%s686 + $0xf0] sm:$0xff]
        %v1437 = vld [vmem:[%s686 + $0xf8] sm:$0xff]
        %v1438 = vld [vmem:[%s696] sm:$0xf]
        %v1440 = vperm.slane %v1438, 0
        %v1441 = vperm.slane %v1438, 1
        %v1442 = vperm.slane %v1438, 2
        %v1443 = vperm.slane %v1438, 3
        %v1480 = vunpack.c.l.b16 %v1406
        %v1481 = vunpack.c.h.b16 %v1406
        %v1482 = vunpack.c.l.b16 %v1407
        %v1483 = vunpack.c.h.b16 %v1407
        %v1484 = vunpack.c.l.b16 %v1408
        %v1485 = vunpack.c.h.b16 %v1408
        %v1486 = vunpack.c.l.b16 %v1409
        %v1487 = vunpack.c.h.b16 %v1409
        %v1488 = vunpack.c.l.b16 %v1410
        %v1489 = vunpack.c.h.b16 %v1410
        %v1490 = vunpack.c.l.b16 %v1411
        %v1491 = vunpack.c.h.b16 %v1411
        %v1492 = vunpack.c.l.b16 %v1412
        %v1493 = vunpack.c.h.b16 %v1412
        %v1494 = vunpack.c.l.b16 %v1413
        %v1495 = vunpack.c.h.b16 %v1413
        %v1496 = vunpack.c.l.b16 %v1414
        %v1497 = vunpack.c.h.b16 %v1414
        %v1498 = vunpack.c.l.b16 %v1415
        %v1499 = vunpack.c.h.b16 %v1415
        %v1500 = vunpack.c.l.b16 %v1416
        %v1501 = vunpack.c.h.b16 %v1416
        %v1502 = vunpack.c.l.b16 %v1417
        %v1503 = vunpack.c.h.b16 %v1417
        %v1504 = vunpack.c.l.b16 %v1418
        %v1505 = vunpack.c.h.b16 %v1418
        %v1506 = vunpack.c.l.b16 %v1419
        %v1507 = vunpack.c.h.b16 %v1419
        %v1508 = vunpack.c.l.b16 %v1420
        %v1509 = vunpack.c.h.b16 %v1420
        %v1510 = vunpack.c.l.b16 %v1421
        %v1511 = vunpack.c.h.b16 %v1421
        %v1512 = vunpack.c.l.b16 %v1422
        %v1513 = vunpack.c.h.b16 %v1422
        %v1514 = vunpack.c.l.b16 %v1423
        %v1515 = vunpack.c.h.b16 %v1423
        %v1516 = vunpack.c.l.b16 %v1424
        %v1517 = vunpack.c.h.b16 %v1424
        %v1518 = vunpack.c.l.b16 %v1425
        %v1519 = vunpack.c.h.b16 %v1425
        %v1520 = vunpack.c.l.b16 %v1426
        %v1521 = vunpack.c.h.b16 %v1426
        %v1522 = vunpack.c.l.b16 %v1427
        %v1523 = vunpack.c.h.b16 %v1427
        %v1524 = vunpack.c.l.b16 %v1428
        %v1525 = vunpack.c.h.b16 %v1428
        %v1526 = vunpack.c.l.b16 %v1429
        %v1527 = vunpack.c.h.b16 %v1429
        %v1528 = vunpack.c.l.b16 %v1430
        %v1529 = vunpack.c.h.b16 %v1430
        %v1530 = vunpack.c.l.b16 %v1431
        %v1531 = vunpack.c.h.b16 %v1431
        %v1532 = vunpack.c.l.b16 %v1432
        %v1533 = vunpack.c.h.b16 %v1432
        %v1534 = vunpack.c.l.b16 %v1433
        %v1535 = vunpack.c.h.b16 %v1433
        %v1536 = vunpack.c.l.b16 %v1434
        %v1537 = vunpack.c.h.b16 %v1434
        %v1538 = vunpack.c.l.b16 %v1435
        %v1539 = vunpack.c.h.b16 %v1435
        %v1540 = vunpack.c.l.b16 %v1436
        %v1541 = vunpack.c.h.b16 %v1436
        %v1542 = vunpack.c.l.b16 %v1437
        %v1543 = vunpack.c.h.b16 %v1437
        %v1544 = vpack.c.b16 %v1484, %v1480
        %v1545 = vpack.c.b16 %v1485, %v1481
        %v1546 = vpack.c.b16 %v1486, %v1482
        %v1547 = vpack.c.b16 %v1487, %v1483
        %v1548 = vpack.c.b16 %v1492, %v1488
        %v1549 = vpack.c.b16 %v1493, %v1489
        %v1550 = vpack.c.b16 %v1494, %v1490
        %v1551 = vpack.c.b16 %v1495, %v1491
        %v1552 = vpack.c.b16 %v1500, %v1496
        %v1553 = vpack.c.b16 %v1501, %v1497
        %v1554 = vpack.c.b16 %v1502, %v1498
        %v1555 = vpack.c.b16 %v1503, %v1499
        %v1556 = vpack.c.b16 %v1508, %v1504
        %v1557 = vpack.c.b16 %v1509, %v1505
        %v1558 = vpack.c.b16 %v1510, %v1506
        %v1559 = vpack.c.b16 %v1511, %v1507
        %v1560 = vpack.c.b16 %v1516, %v1512
        %v1561 = vpack.c.b16 %v1517, %v1513
        %v1562 = vpack.c.b16 %v1518, %v1514
        %v1563 = vpack.c.b16 %v1519, %v1515
        %v1564 = vpack.c.b16 %v1524, %v1520
        %v1565 = vpack.c.b16 %v1525, %v1521
        %v1566 = vpack.c.b16 %v1526, %v1522
        %v1567 = vpack.c.b16 %v1527, %v1523
        %v1568 = vpack.c.b16 %v1532, %v1528
        %v1569 = vpack.c.b16 %v1533, %v1529
        %v1570 = vpack.c.b16 %v1534, %v1530
        %v1571 = vpack.c.b16 %v1535, %v1531
        %v1572 = vpack.c.b16 %v1540, %v1536
        %v1573 = vpack.c.b16 %v1541, %v1537
        %v1574 = vpack.c.b16 %v1542, %v1538
        %v1575 = vpack.c.b16 %v1543, %v1539
        %1608 = vmatpush.bf16.msra.mxu0 %v1572
        %1609 = vmatpush.bf16.msra.mxu0 %v1568
        %1610 = vmatpush.bf16.msra.mxu0 %v1564
        %1611 = vmatpush.bf16.msra.mxu0 %v1560
        %1612 = vmatpush.bf16.msra.mxu0 %v1556
        %1613 = vmatpush.bf16.msra.mxu0 %v1552
        %1614 = vmatpush.bf16.msra.mxu0 %v1548
        %1615 = vmatpush.bf16.msra.mxu0 %v1544
        %1616 = vmatmul.bf16.gmra.mxu0 %v1405
        %v1617 = vpop.f32.mrf.mxu0
        %v1618 = vadd.f32 %v1440, %v1617
        %v1619 = vpop.f32.mrf.mxu0
        %1620 = vdwg.mxu0
        %1621 = vmatpush.bf16.msra.mxu0 %v1573
        %1622 = vmatpush.bf16.msra.mxu0 %v1569
        %1623 = vmatpush.bf16.msra.mxu0 %v1565
        %1624 = vmatpush.bf16.msra.mxu0 %v1561
        %1625 = vmatpush.bf16.msra.mxu0 %v1557
        %1626 = vmatpush.bf16.msra.mxu0 %v1553
        %1627 = vmatpush.bf16.msra.mxu0 %v1549
        %1628 = vmatpush.bf16.msra.mxu0 %v1545
        %1629 = vmatmul.bf16.gmra.mxu0 %v1405
        %v1630 = vpop.f32.mrf.mxu0
        %v1631 = vadd.f32 %v1441, %v1630
        %v1632 = vpop.f32.mrf.mxu0
        %1633 = vdwg.mxu0
        %1634 = vmatpush.bf16.msra.mxu0 %v1574
        %1635 = vmatpush.bf16.msra.mxu0 %v1570
        %1636 = vmatpush.bf16.msra.mxu0 %v1566
        %1637 = vmatpush.bf16.msra.mxu0 %v1562
        %1638 = vmatpush.bf16.msra.mxu0 %v1558
        %1639 = vmatpush.bf16.msra.mxu0 %v1554
        %1640 = vmatpush.bf16.msra.mxu0 %v1550
        %1641 = vmatpush.bf16.msra.mxu0 %v1546
        %1642 = vmatmul.bf16.gmra.mxu0 %v1405
        %v1643 = vpop.f32.mrf.mxu0
        %v1644 = vadd.f32 %v1442, %v1643
        %v1645 = vpop.f32.mrf.mxu0
        %1646 = vdwg.mxu0
        %1647 = vmatpush.bf16.msra.mxu0 %v1575
        %1648 = vmatpush.bf16.msra.mxu0 %v1571
        %1649 = vmatpush.bf16.msra.mxu0 %v1567
        %1650 = vmatpush.bf16.msra.mxu0 %v1563
        %1651 = vmatpush.bf16.msra.mxu0 %v1559
        %1652 = vmatpush.bf16.msra.mxu0 %v1555
        %1653 = vmatpush.bf16.msra.mxu0 %v1551
        %1654 = vmatpush.bf16.msra.mxu0 %v1547
        %1655 = vmatmul.bf16.gmra.mxu0 %v1405
        %v1656 = vpop.f32.mrf.mxu0
        %v1657 = vadd.f32 %v1443, %v1656
        %v1658 = vpop.f32.mrf.mxu0
        %1659 = vdwg.mxu0
        %v1660 = vmax.f32 %v1618, 0.0
        %v1661 = vmax.f32 %v1631, 0.0
        %v1662 = vmax.f32 %v1644, 0.0
        %v1663 = vmax.f32 %v1657, 0.0
        %v1664 = vpack.c.bf16 %v1660, %v1660
        %v1665 = vpack.c.bf16 %v1661, %v1661
        %v1666 = vpack.c.bf16 %v1662, %v1662
        %v1667 = vpack.c.bf16 %v1663, %v1663
        %v1668 = vld [vmem:[%s706] sm:$0xf]
        %v1669 = vld [vmem:[%s706 + $0x4] sm:$0xf]
        %v1670 = vld [vmem:[%s706 + $0x8] sm:$0xf]
        %v1671 = vld [vmem:[%s706 + $0xc] sm:$0xf]
        %v1672 = vld [vmem:[%s706 + $0x10] sm:$0xf]
        %v1673 = vld [vmem:[%s706 + $0x14] sm:$0xf]
        %v1674 = vld [vmem:[%s706 + $0x18] sm:$0xf]
        %v1675 = vld [vmem:[%s706 + $0x1c] sm:$0xf]
        %v1676 = vld [vmem:[%s706 + $0x20] sm:$0xf]
        %v1677 = vld [vmem:[%s706 + $0x24] sm:$0xf]
        %v1678 = vld [vmem:[%s706 + $0x28] sm:$0xf]
        %v1679 = vld [vmem:[%s706 + $0x2c] sm:$0xf]
        %v1680 = vld [vmem:[%s706 + $0x30] sm:$0xf]
        %v1681 = vld [vmem:[%s706 + $0x34] sm:$0xf]
        %v1682 = vld [vmem:[%s706 + $0x38] sm:$0xf]
        %v1683 = vld [vmem:[%s706 + $0x3c] sm:$0xf]
        %v1684 = vld [vmem:[%s706 + $0x40] sm:$0xf]
        %v1685 = vld [vmem:[%s706 + $0x44] sm:$0xf]
        %v1686 = vld [vmem:[%s706 + $0x48] sm:$0xf]
        %v1687 = vld [vmem:[%s706 + $0x4c] sm:$0xf]
        %v1688 = vld [vmem:[%s706 + $0x50] sm:$0xf]
        %v1689 = vld [vmem:[%s706 + $0x54] sm:$0xf]
        %v1690 = vld [vmem:[%s706 + $0x58] sm:$0xf]
        %v1691 = vld [vmem:[%s706 + $0x5c] sm:$0xf]
        %v1692 = vld [vmem:[%s706 + $0x60] sm:$0xf]
        %v1693 = vld [vmem:[%s706 + $0x64] sm:$0xf]
        %v1694 = vld [vmem:[%s706 + $0x68] sm:$0xf]
        %v1695 = vld [vmem:[%s706 + $0x6c] sm:$0xf]
        %v1696 = vld [vmem:[%s706 + $0x70] sm:$0xf]
        %v1697 = vld [vmem:[%s706 + $0x74] sm:$0xf]
        %v1698 = vld [vmem:[%s706 + $0x78] sm:$0xf]
        %v1699 = vld [vmem:[%s706 + $0x7c] sm:$0xf]
        %v1700 = vld [vmem:[%s706 + $0x80] sm:$0xf]
        %v1701 = vld [vmem:[%s706 + $0x84] sm:$0xf]
        %v1702 = vld [vmem:[%s706 + $0x88] sm:$0xf]
        %v1703 = vld [vmem:[%s706 + $0x8c] sm:$0xf]
        %v1704 = vld [vmem:[%s706 + $0x90] sm:$0xf]
        %v1705 = vld [vmem:[%s706 + $0x94] sm:$0xf]
        %v1706 = vld [vmem:[%s706 + $0x98] sm:$0xf]
        %v1707 = vld [vmem:[%s706 + $0x9c] sm:$0xf]
        %v1708 = vld [vmem:[%s706 + $0xa0] sm:$0xf]
        %v1709 = vld [vmem:[%s706 + $0xa4] sm:$0xf]
        %v1710 = vld [vmem:[%s706 + $0xa8] sm:$0xf]
        %v1711 = vld [vmem:[%s706 + $0xac] sm:$0xf]
        %v1712 = vld [vmem:[%s706 + $0xb0] sm:$0xf]
        %v1713 = vld [vmem:[%s706 + $0xb4] sm:$0xf]
        %v1714 = vld [vmem:[%s706 + $0xb8] sm:$0xf]
        %v1715 = vld [vmem:[%s706 + $0xbc] sm:$0xf]
        %v1716 = vld [vmem:[%s706 + $0xc0] sm:$0xf]
        %v1717 = vld [vmem:[%s706 + $0xc4] sm:$0xf]
        %v1718 = vld [vmem:[%s706 + $0xc8] sm:$0xf]
        %v1719 = vld [vmem:[%s706 + $0xcc] sm:$0xf]
        %v1720 = vld [vmem:[%s706 + $0xd0] sm:$0xf]
        %v1721 = vld [vmem:[%s706 + $0xd4] sm:$0xf]
        %v1722 = vld [vmem:[%s706 + $0xd8] sm:$0xf]
        %v1723 = vld [vmem:[%s706 + $0xdc] sm:$0xf]
        %v1724 = vld [vmem:[%s706 + $0xe0] sm:$0xf]
        %v1725 = vld [vmem:[%s706 + $0xe4] sm:$0xf]
        %v1726 = vld [vmem:[%s706 + $0xe8] sm:$0xf]
        %v1727 = vld [vmem:[%s706 + $0xec] sm:$0xf]
        %v1728 = vld [vmem:[%s706 + $0xf0] sm:$0xf]
        %v1729 = vld [vmem:[%s706 + $0xf4] sm:$0xf]
        %v1730 = vld [vmem:[%s706 + $0xf8] sm:$0xf]
        %v1731 = vld [vmem:[%s706 + $0xfc] sm:$0xf]
        %v1732 = vld [vmem:[%s807] sm:$0x1]
        %v1734 = vperm.slane %v1732, 0
        %v1800 = vunpack.c.l.b16 %v1668
        %v1801 = vunpack.c.l.b16 %v1669
        %v1802 = vunpack.c.l.b16 %v1670
        %v1803 = vunpack.c.l.b16 %v1671
        %v1804 = vunpack.c.l.b16 %v1672
        %v1805 = vunpack.c.l.b16 %v1673
        %v1806 = vunpack.c.l.b16 %v1674
        %v1807 = vunpack.c.l.b16 %v1675
        %v1808 = vunpack.c.l.b16 %v1676
        %v1809 = vunpack.c.l.b16 %v1677
        %v1810 = vunpack.c.l.b16 %v1678
        %v1811 = vunpack.c.l.b16 %v1679
        %v1812 = vunpack.c.l.b16 %v1680
        %v1813 = vunpack.c.l.b16 %v1681
        %v1814 = vunpack.c.l.b16 %v1682
        %v1815 = vunpack.c.l.b16 %v1683
        %v1816 = vunpack.c.l.b16 %v1684
        %v1817 = vunpack.c.l.b16 %v1685
        %v1818 = vunpack.c.l.b16 %v1686
        %v1819 = vunpack.c.l.b16 %v1687
        %v1820 = vunpack.c.l.b16 %v1688
        %v1821 = vunpack.c.l.b16 %v1689
        %v1822 = vunpack.c.l.b16 %v1690
        %v1823 = vunpack.c.l.b16 %v1691
        %v1824 = vunpack.c.l.b16 %v1692
        %v1825 = vunpack.c.l.b16 %v1693
        %v1826 = vunpack.c.l.b16 %v1694
        %v1827 = vunpack.c.l.b16 %v1695
        %v1828 = vunpack.c.l.b16 %v1696
        %v1829 = vunpack.c.l.b16 %v1697
        %v1830 = vunpack.c.l.b16 %v1698
        %v1831 = vunpack.c.l.b16 %v1699
        %v1832 = vunpack.c.l.b16 %v1700
        %v1833 = vunpack.c.l.b16 %v1701
        %v1834 = vunpack.c.l.b16 %v1702
        %v1835 = vunpack.c.l.b16 %v1703
        %v1836 = vunpack.c.l.b16 %v1704
        %v1837 = vunpack.c.l.b16 %v1705
        %v1838 = vunpack.c.l.b16 %v1706
        %v1839 = vunpack.c.l.b16 %v1707
        %v1840 = vunpack.c.l.b16 %v1708
        %v1841 = vunpack.c.l.b16 %v1709
        %v1842 = vunpack.c.l.b16 %v1710
        %v1843 = vunpack.c.l.b16 %v1711
        %v1844 = vunpack.c.l.b16 %v1712
        %v1845 = vunpack.c.l.b16 %v1713
        %v1846 = vunpack.c.l.b16 %v1714
        %v1847 = vunpack.c.l.b16 %v1715
        %v1848 = vunpack.c.l.b16 %v1716
        %v1849 = vunpack.c.l.b16 %v1717
        %v1850 = vunpack.c.l.b16 %v1718
        %v1851 = vunpack.c.l.b16 %v1719
        %v1852 = vunpack.c.l.b16 %v1720
        %v1853 = vunpack.c.l.b16 %v1721
        %v1854 = vunpack.c.l.b16 %v1722
        %v1855 = vunpack.c.l.b16 %v1723
        %v1856 = vunpack.c.l.b16 %v1724
        %v1857 = vunpack.c.l.b16 %v1725
        %v1858 = vunpack.c.l.b16 %v1726
        %v1859 = vunpack.c.l.b16 %v1727
        %v1860 = vunpack.c.l.b16 %v1728
        %v1861 = vunpack.c.l.b16 %v1729
        %v1862 = vunpack.c.l.b16 %v1730
        %v1863 = vunpack.c.l.b16 %v1731
        %v1864 = vpack.c.b16 %v1801, %v1800
        %v1865 = vpack.c.b16 %v1803, %v1802
        %v1866 = vpack.c.b16 %v1805, %v1804
        %v1867 = vpack.c.b16 %v1807, %v1806
        %v1868 = vpack.c.b16 %v1809, %v1808
        %v1869 = vpack.c.b16 %v1811, %v1810
        %v1870 = vpack.c.b16 %v1813, %v1812
        %v1871 = vpack.c.b16 %v1815, %v1814
        %v1872 = vpack.c.b16 %v1817, %v1816
        %v1873 = vpack.c.b16 %v1819, %v1818
        %v1874 = vpack.c.b16 %v1821, %v1820
        %v1875 = vpack.c.b16 %v1823, %v1822
        %v1876 = vpack.c.b16 %v1825, %v1824
        %v1877 = vpack.c.b16 %v1827, %v1826
        %v1878 = vpack.c.b16 %v1829, %v1828
        %v1879 = vpack.c.b16 %v1831, %v1830
        %v1880 = vpack.c.b16 %v1833, %v1832
        %v1881 = vpack.c.b16 %v1835, %v1834
        %v1882 = vpack.c.b16 %v1837, %v1836
        %v1883 = vpack.c.b16 %v1839, %v1838
        %v1884 = vpack.c.b16 %v1841, %v1840
        %v1885 = vpack.c.b16 %v1843, %v1842
        %v1886 = vpack.c.b16 %v1845, %v1844
        %v1887 = vpack.c.b16 %v1847, %v1846
        %v1888 = vpack.c.b16 %v1849, %v1848
        %v1889 = vpack.c.b16 %v1851, %v1850
        %v1890 = vpack.c.b16 %v1853, %v1852
        %v1891 = vpack.c.b16 %v1855, %v1854
        %v1892 = vpack.c.b16 %v1857, %v1856
        %v1893 = vpack.c.b16 %v1859, %v1858
        %v1894 = vpack.c.b16 %v1861, %v1860
        %v1895 = vpack.c.b16 %v1863, %v1862
        %1928 = vmatpush.bf16.msra.mxu0 %v1871
        %1929 = vmatpush.bf16.msra.mxu0 %v1870
        %1930 = vmatpush.bf16.msra.mxu0 %v1869
        %1931 = vmatpush.bf16.msra.mxu0 %v1868
        %1932 = vmatpush.bf16.msra.mxu0 %v1867
        %1933 = vmatpush.bf16.msra.mxu0 %v1866
        %1934 = vmatpush.bf16.msra.mxu0 %v1865
        %1935 = vmatpush.bf16.msra.mxu0 %v1864
        %1936 = vmatmul.bf16.gmra.mxu0 %v1664
        %v1937 = vpop.f32.mrf.mxu0
        %v1938 = vadd.f32 %v1734, %v1937
        %v1939 = vpop.f32.mrf.mxu0
        %1940 = vdwg.mxu0
        %1941 = vmatpush.bf16.msra.mxu0 %v1879
        %1942 = vmatpush.bf16.msra.mxu0 %v1878
        %1943 = vmatpush.bf16.msra.mxu0 %v1877
        %1944 = vmatpush.bf16.msra.mxu0 %v1876
        %1945 = vmatpush.bf16.msra.mxu0 %v1875
        %1946 = vmatpush.bf16.msra.mxu0 %v1874
        %1947 = vmatpush.bf16.msra.mxu0 %v1873
        %1948 = vmatpush.bf16.msra.mxu0 %v1872
        %1949 = vmatmul.bf16.gmra.mxu0 %v1665
        %v1950 = vpop.f32.mrf.mxu0
        %v1951 = vadd.f32 %v1938, %v1950
        %v1952 = vpop.f32.mrf.mxu0
        %1953 = vdwg.mxu0
        %1954 = vmatpush.bf16.msra.mxu0 %v1887
        %1955 = vmatpush.bf16.msra.mxu0 %v1886
        %1956 = vmatpush.bf16.msra.mxu0 %v1885
        %1957 = vmatpush.bf16.msra.mxu0 %v1884
        %1958 = vmatpush.bf16.msra.mxu0 %v1883
        %1959 = vmatpush.bf16.msra.mxu0 %v1882
        %1960 = vmatpush.bf16.msra.mxu0 %v1881
        %1961 = vmatpush.bf16.msra.mxu0 %v1880
        %1962 = vmatmul.bf16.gmra.mxu0 %v1666
        %v1963 = vpop.f32.mrf.mxu0
        %v1964 = vadd.f32 %v1951, %v1963
        %v1965 = vpop.f32.mrf.mxu0
        %1966 = vdwg.mxu0
        %1967 = vmatpush.bf16.msra.mxu0 %v1895
        %1968 = vmatpush.bf16.msra.mxu0 %v1894
        %1969 = vmatpush.bf16.msra.mxu0 %v1893
        %1970 = vmatpush.bf16.msra.mxu0 %v1892
        %1971 = vmatpush.bf16.msra.mxu0 %v1891
        %1972 = vmatpush.bf16.msra.mxu0 %v1890
        %1973 = vmatpush.bf16.msra.mxu0 %v1889
        %1974 = vmatpush.bf16.msra.mxu0 %v1888
        %1975 = vmatmul.bf16.gmra.mxu0 %v1667
        %v1976 = vpop.f32.mrf.mxu0
        %v1977 = vadd.f32 %v1964, %v1976
        %v1978 = vpop.f32.mrf.mxu0
        %1979 = vdwg.mxu0
        %v1980 = vadd.f32 %v1977, %v1404
        %1981 = vadd.xlane.f32.xlu0 %v1980
        %v1982 = vpop.xlane.xlu0 %1981
        %v1983 = vmul.f32 %v1982, %v1376
        %v1984 = vsub.f32 %v1980, %v1983
        %v1985 = vmul.f32 %v1984, %v1984
        %1986 = vadd.xlane.f32.xlu0 %v1985
        %v1987 = vpop.xlane.xlu0 %1986
        %v1988 = vmul.f32 %v1987, %v1376
        %v1989 = vadd.f32 %v1988, 1e-05
        %v1990 = vrsqrt.pop %v1989
        %v1991 = vmul.f32 %v1990, %v1989
        %v1992 = vmul.f32 %v1991, %v1990
        %v1993 = vmul.f32 0.5, %v1992
        %v1994 = vsub.f32 1.5, %v1993
        %v1995 = vmul.f32 %v1990, %v1994
        %vm1996 = vweird.f32 %v1989
        %vm1997 = vweird.f32 %v1990
        %vm1998 = vmor %vm1996, %vm1997
        %v1999 = vsel %vm1998, %v1990, %v1995
        %v2000 = vmul.f32 %v1984, %v1999
        %v2001 = vld [vmem:[%s810] sm:$0x1]
        %v2003 = vperm.slane %v2001, 0
        %v2005 = vmul.f32 %v2000, %v2003
        %v2006 = vld [vmem:[%s813] sm:$0x1]
        %v2008 = vperm.slane %v2006, 0
        %v2010 = vadd.f32 %v2005, %v2008
        %2011 = vst [vmem:[#allocation2] sm:$0xff] %v2010
        %2012 = vst [vmem:[%s798] sm:$0xff] %v2010
        %s2013 = sand.u32 %s402, 1
        %s2014 = scalar_lea.sflag [#allocation5], %s2013
        %s2015 = sand.u32 %s402, 1
        %s2016 = smul.addr %s2015, 8
        %s2017 = scalar_lea.vmem [#allocation17], %s2016
        // Predicated region
        $region109: #{tpu_custom_call.1} parent=71 // pred_check
          %p2018 = pneg %p412
        $region110: #{tpu_custom_call.1} parent=71 // pred_check_branch
          %2020 = sbr.rel (%p2018) target = $region112
        $region111: #{tpu_custom_call.1} parent=71 // pred_region
          %2022 = vsyncadd %s2014, 0
          %s2023 = smul.addr %s46, 2
          %s2024 = sadd.s32 %s47, %s2023
          %s2025 = smul.addr %s2024, 8
          %s2026 = scalar_lea.hbm %s13, %s2025
          %s2028 = sshll.u32 %s2017, 4
          %s2029 = int_to_ptr.vmem [resolvable:$true] %s2028
          %s2030 = sshll.u32 %s2026, 4
          %s2031 = int_to_ptr.hbm [resolvable:$true] %s2030
          %2033 = dma.vmem_to_hbm [thread:$0]  %s2029, 128, %s2031, %s2014
        $region112: #{tpu_custom_call.1} parent=71 // pred_fallthru
          _
      $region72: #{tpu_custom_call.1} parent=5 // pred_fallthru
        _
      %p2034 = scmp.le.s32.totalorder 2, %s37
      // Predicated region
      $region113: #{tpu_custom_call.1} parent=5 // pred_check
        %p2035 = pneg %p2034
      $region114: #{tpu_custom_call.1} parent=5 // pred_check_branch
        %2037 = sbr.rel (%p2035) target = $region116
      $region115: #{tpu_custom_call.1} parent=5 // pred_region
        %s2038 = ssub.s32 %s37, 2
        // Predicated region
        $region117: #{tpu_custom_call.1} parent=115 // pred_check
          %p2039 = pneg %p418
        $region118: #{tpu_custom_call.1} parent=115 // pred_check_branch
          %2041 = sbr.rel (%p2039) target = $region120
        $region119: #{tpu_custom_call.1} parent=115 // pred_region
          %s2042 = sand.u32 %s403, 1
          %s2043 = scalar_lea.sflag [#allocation5], %s2042
          %s2044 = sand.u32 %s403, 1
          %s2045 = smul.addr %s2044, 8
          %s2046 = scalar_lea.vmem [#allocation17], %s2045
          %2048 = dma.done %s2043, 128
        $region120: #{tpu_custom_call.1} parent=115 // pred_fallthru
          _
      $region116: #{tpu_custom_call.1} parent=5 // pred_fallthru
        _
    $region6: #{tpu_custom_call.1} parent=1 // loop_footer
      %s41 = sadd.s32 1, %s37
    $region7: #{tpu_custom_call.1} parent=1 // loop_footer_branch
      %36 = sbr.rel target = $region3
    $region8: #{tpu_custom_call.1} parent=1 // loop_exit
      _
    %2049 = vsyncpa [#allocation4], 1
    %s2050 = scalar_lea.sflag [#allocation4], 1
    %2051 = vsyncpa %s2050, 1
    %2052 = vsyncpa [#allocation7], 1
    %s2053 = scalar_lea.sflag [#allocation7], 1
    %2054 = vsyncpa %s2053, 1
    %2055 = vsyncpa [#allocation10], 1
    %s2056 = scalar_lea.sflag [#allocation10], 1
    %2057 = vsyncpa %s2056, 1
    %2058 = vsyncpa [#allocation13], 1
    %s2059 = scalar_lea.sflag [#allocation13], 1
    %2060 = vsyncpa %s2059, 1
    %2061 = vsyncpa [#allocation16], 1
    %s2062 = scalar_lea.sflag [#allocation16], 1
    %2063 = vsyncpa %s2062, 1
    %2064 = vsyncpa [#allocation5], 1
    %s2065 = scalar_lea.sflag [#allocation5], 1
    %2066 = vsyncpa %s2065, 1

</llo_original>
